<compile_context>
chip_gen: v6e
topology: v6e:2x2x1
jax: 0.10.0
libtpu: 0.0.40
codegen_flags: <defaults>
</compile_context>

<pallas_src>
import functools

import jax
import jax.numpy as jnp
from jax.experimental import pallas as pl
from jax.experimental.pallas import tpu as pltpu

_EPS = 1e-5


# ---------------------------------------------------------------------------
# kernels
# ---------------------------------------------------------------------------
def _xsum_kernel(x_ref, out_ref, *, batch, tile, masked):
    """Accumulate sum(x) over the batch into a (1, 3) output."""
    t = pl.program_id(0)

    @pl.when(t == 0)
    def _init():
        out_ref[...] = jnp.zeros_like(out_ref)

    x = x_ref[...]                                               # (tile, 3)
    if masked:  # ragged last tile: drop out-of-batch rows from the statistics
        row = jax.lax.broadcasted_iota(jnp.int32, x.shape, 0) + t * tile
        x = jnp.where(row < batch, x, 0.0)
    out_ref[...] += jnp.sum(x, axis=0, keepdims=True)


def _xcov_kernel(mean_ref, x_ref, out_ref, *, batch, tile, masked):
    """Accumulate the mean-centred 3x3 second moment of x (two-pass variance)."""
    t = pl.program_id(0)

    @pl.when(t == 0)
    def _init():
        out_ref[...] = jnp.zeros_like(out_ref)

    xc = x_ref[...] - mean_ref[...]                              # (tile, 3)
    if masked:
        row = jax.lax.broadcasted_iota(jnp.int32, xc.shape, 0) + t * tile
        xc = jnp.where(row < batch, xc, 0.0)
    out_ref[...] += jnp.dot(xc.T, xc, preferred_element_type=jnp.float32)


def _h2_stats_kernel(x_ref, w1a_ref, w2_ref, out_ref, *, batch, tile, masked):
    """Accumulate sum / sum-of-squares of h2 = W2 @ relu(W1_eff x + b1_eff)."""
    t = pl.program_id(0)

    @pl.when(t == 0)
    def _init():
        out_ref[...] = jnp.zeros_like(out_ref)

    x_t = x_ref[...].T                                           # (3, tile)
    a1 = jnp.maximum(
        jnp.dot(w1a_ref[:, 0:3], x_t, preferred_element_type=jnp.float32)
        + w1a_ref[:, 3:4], 0.0)                                  # (36, tile)
    h2 = jnp.dot(w2_ref[...], a1, preferred_element_type=jnp.float32)   # (48, tile)

    if masked:
        lane = jax.lax.broadcasted_iota(jnp.int32, h2.shape, 1) + t * tile
        valid = lane < batch
        s = jnp.sum(jnp.where(valid, h2, 0.0), axis=1, keepdims=True)
        s2 = jnp.sum(jnp.where(valid, h2 * h2, 0.0), axis=1, keepdims=True)
    else:
        s = jnp.sum(h2, axis=1, keepdims=True)
        s2 = jnp.sum(h2 * h2, axis=1, keepdims=True)
    out_ref[...] += jnp.concatenate([s, s2], axis=1)             # (48, 2)


def _apply_kernel(x_ref, w1a_ref, w2a_ref, w3a_ref, out_ref):
    """Fully folded MLP on one batch tile; stores a lane-legal (tile, 24) block."""
    x_t = x_ref[...].T                                           # (3, tile)
    a1 = jnp.maximum(
        jnp.dot(w1a_ref[:, 0:3], x_t, preferred_element_type=jnp.float32)
        + w1a_ref[:, 3:4], 0.0)                                  # (36, tile)
    a2 = jnp.maximum(
        jnp.dot(w2a_ref[:, 0:36], a1, preferred_element_type=jnp.float32)
        + w2a_ref[:, 36:37], 0.0)                                # (48, tile)
    o = jnp.maximum(
        jnp.dot(w3a_ref[:, 0:48], a2, preferred_element_type=jnp.float32)
        + w3a_ref[:, 48:49], 0.0)                                # (24, tile)
    out_ref[...] = o.T                                           # (tile, 24)


# ---------------------------------------------------------------------------
# wrapper
# ---------------------------------------------------------------------------
def _pick_batch_tile(batch):
    """Largest lane-dense batch tile that comfortably fits the device's VMEM."""
    try:
        vmem_cap = pltpu.get_tpu_info().vmem_capacity_bytes
    except Exception:
        vmem_cap = 128 * 1024 * 1024
    max_bt = 32768 if vmem_cap <= 64 * 1024 * 1024 else 65536    # v7x vs v5e/v6e
    # batch <= max_bt -> single tile; block == full array dims is always legal.
    return batch if batch <= max_bt else max_bt


def _vmem_limit(bt):
    # Double-buffered (bt,3)+(bt,24) I/O plus lane-dense f32 intermediates
    # (3,bt)+(36,bt)+(48,bt)+(24,bt) and relu/transpose copies, with headroom.
    est = int(1500 * bt)
    return max(32 * 1024 * 1024, min(est, 100 * 1024 * 1024))


def bp_model_forward(x, params):
    """x: (B, 3) float32 -> (B, 24) float32 (PyTorch training-mode forward)."""
    B = x.shape[0]
    bt = _pick_batch_tile(B)
    n_tiles = pl.cdiv(B, bt)
    masked = (n_tiles * bt != B)
    vmem_lim = _vmem_limit(bt)
    f32 = jnp.float32

    x_spec = pl.BlockSpec((bt, 3), lambda t: (t, 0))

    def _full(shape):
        # whole-array operand, constant block index -> stays VMEM-resident
        return pl.BlockSpec(shape, lambda t: (0, 0))

    arb = pltpu.CompilerParams(dimension_semantics=("arbitrary",),
                               vmem_limit_bytes=vmem_lim)
    par = pltpu.CompilerParams(dimension_semantics=("parallel",),
                               vmem_limit_bytes=vmem_lim)

    # ---- pass A1: sum(x) over the batch ------------------------------------
    sum_x = pl.pallas_call(
        functools.partial(_xsum_kernel, batch=B, tile=bt, masked=masked),
        out_shape=jax.ShapeDtypeStruct((1, 3), f32),
        grid=(n_tiles,),
        in_specs=[x_spec],
        out_specs=_full((1, 3)),
        compiler_params=arb,
    )(x)
    mean0 = sum_x / B                                            # (1, 3)

    # ---- pass A2: centred 3x3 second moment of x ---------------------------
    cov_x = pl.pallas_call(
        functools.partial(_xcov_kernel, batch=B, tile=bt, masked=masked),
        out_shape=jax.ShapeDtypeStruct((3, 3), f32),
        grid=(n_tiles,),
        in_specs=[_full((1, 3)), x_spec],
        out_specs=_full((3, 3)),
        compiler_params=arb,
    )(mean0, x) / B                                              # biased Cov(x)

    # ---- glue: fold BN0 + BN1 into W1_eff / b1_eff (b1, beta0 cancel) ------
    g0 = params["g0"]
    w1 = params["w1"]
    g1, be1 = params["g1"], params["be1"]
    w2 = params["w2"]
    g2, be2 = params["g2"], params["be2"]
    w3, b3 = params["w3"], params["b3"]

    var0 = jnp.diagonal(cov_x)                                   # (3,)
    s0 = g0 * jax.lax.rsqrt(var0 + _EPS)                         # BN0 scale
    m1 = w1 * s0[None, :]                                        # (36, 3)
    var1 = jnp.einsum("ia,ab,ib->i", m1, cov_x, m1)              # analytic BN1 var
    s1 = g1 * jax.lax.rsqrt(var1 + _EPS)                         # BN1 scale
    w1_eff = m1 * s1[:, None]                                    # (36, 3)
    b1_eff = be1 - w1_eff @ mean0[0]                             # (36,)
    w1a = jnp.concatenate([w1_eff, b1_eff[:, None]], axis=1)     # (36, 4)

    # ---- pass B: batch statistics of h2 = W2 @ relu(W1_eff x + b1_eff) -----
    h2_stats = pl.pallas_call(
        functools.partial(_h2_stats_kernel, batch=B, tile=bt, masked=masked),
        out_shape=jax.ShapeDtypeStruct((48, 2), f32),
        grid=(n_tiles,),
        in_specs=[x_spec, _full((36, 4)), _full((48, 36))],
        out_specs=_full((48, 2)),
        compiler_params=arb,
    )(x, w1a, w2)
    mean2 = h2_stats[:, 0] / B                                   # (48,)  (b2 cancels)
    var2 = h2_stats[:, 1] / B - mean2 * mean2
    s2 = g2 * jax.lax.rsqrt(var2 + _EPS)                         # BN2 scale
    w2_eff = w2 * s2[:, None]                                    # (48, 36)
    b2_eff = be2 - s2 * mean2                                    # (48,)
    w2a = jnp.concatenate([w2_eff, b2_eff[:, None]], axis=1)     # (48, 37)
    w3a = jnp.concatenate([w3, b3[:, None]], axis=1)             # (24, 49)

    # ---- pass C: fused apply, lane-dense compute, direct (bt, 24) store ----
    out = pl.pallas_call(
        _apply_kernel,
        out_shape=jax.ShapeDtypeStruct((B, 24), f32),
        grid=(n_tiles,),
        in_specs=[x_spec, _full((36, 4)), _full((48, 37)), _full((24, 49))],
        out_specs=pl.BlockSpec((bt, 24), lambda t: (t, 0)),
        compiler_params=par,
    )(x, w1a, w2a, w3a)
    return out


# ---------------------------------------------------------------------------
# parameters + pure-JAX reference (PyTorch semantics)
# ---------------------------------------------------------------------------
def init_params(key):
    """PyTorch-default-style init. Linear weights are (out, in); biases 1-D."""
    ks = jax.random.split(key, 3)

    def lin(k, fan_in, fan_out):
        kw, kb = jax.random.split(k)
        bound = float(fan_in) ** -0.5
        w = jax.random.uniform(kw, (fan_out, fan_in), jnp.float32, -bound, bound)
        b = jax.random.uniform(kb, (fan_out,), jnp.float32, -bound, bound)
        return w, b

    w1, b1 = lin(ks[0], 3, 36)
    w2, b2 = lin(ks[1], 36, 48)
    w3, b3 = lin(ks[2], 48, 24)
    ones = lambda n: jnp.ones((n,), jnp.float32)
    zeros = lambda n: jnp.zeros((n,), jnp.float32)
    return dict(
        w1=w1, b1=b1, w2=w2, b2=b2, w3=w3, b3=b3,
        g0=ones(3), be0=zeros(3),
        g1=ones(36), be1=zeros(36),
        g2=ones(48), be2=zeros(48),
    )


def bp_reference(x, p):
    """Straightforward JAX mirror of the PyTorch forward (training-mode BN)."""
    def bn(h, g, b):
        mean = jnp.mean(h, axis=0, keepdims=True)
        var = jnp.mean((h - mean) ** 2, axis=0, keepdims=True)
        return (h - mean) * jax.lax.rsqrt(var + _EPS) * g + b

    h = bn(x, p["g0"], p["be0"])
    h = jnp.maximum(bn(h @ p["w1"].T + p["b1"], p["g1"], p["be1"]), 0.0)
    h = jnp.maximum(bn(h @ p["w2"].T + p["b2"], p["g2"], p["be2"]), 0.0)
    return jnp.maximum(h @ p["w3"].T + p["b3"], 0.0)


if __name__ == "__main__":
    key = jax.random.PRNGKey(0)
    kx, kp = jax.random.split(key)
    B = 256
    # non-zero mean / non-unit std so the BatchNorm path is exercised
    x = 3.0 + 2.0 * jax.random.normal(kx, (B, 3), jnp.float32)
    params = init_params(kp)

    fwd = jax.jit(bp_model_forward)
    out = jax.block_until_ready(fwd(x, params))
    assert out.shape == (B, 24) and out.dtype == jnp.float32

    ref = bp_reference(x, params)
    err = float(jnp.max(jnp.abs(out - ref)))
    assert jnp.allclose(out, ref, atol=1e-3, rtol=1e-3), f"max abs err = {err:e}"
    print("KERNEL_OK")
</pallas_src>

<mosaic_0001>
module attributes {stable_mosaic.version = 11 : i64} {
  func.func @_xsum_kernel(%arg0: i32, %arg1: memref<256x3xf32, #tpu.memory_space<vmem>>, %arg2: memref<1x3xf32, #tpu.memory_space<vmem>>) attributes {dimension_semantics = [#tpu.dimension_semantics<arbitrary>], iteration_bounds = array<i64: 1>, scalar_prefetch = 0 : i64, scratch_operands = 0 : i64, tpu.core_type = #tpu.core_type<tc>, window_params = [{transform_indices = @transform_0, window_bounds = array<i64: 256, 3>}, {pipeline_mode = #tpu.pipeline_mode<synchronous>, transform_indices = @transform_1, window_bounds = array<i64: 1, 3>}]} {
    %c0_i32 = arith.constant 0 : i32
    %0 = arith.cmpi eq, %arg0, %c0_i32 : i32
    %1 = arith.extui %0 : i1 to i32
    %c0_i32_0 = arith.constant 0 : i32
    %2 = arith.cmpi ne, %1, %c0_i32_0 : i32
    scf.if %2 {
      %cst_6 = arith.constant 0.000000e+00 : f32
      %9 = vector.broadcast %cst_6 : f32 to vector<1x3xf32>
      %c0_7 = arith.constant 0 : index
      %c0_8 = arith.constant 0 : index
      %10 = vector.load %arg2[%c0_7, %c0_8] : memref<1x3xf32, #tpu.memory_space<vmem>>, vector<1x3xf32>
      tpu.vector_store %arg2[%c0_7, %c0_8], %9 {strides = array<i32>} : memref<1x3xf32, #tpu.memory_space<vmem>>, vector<1x3xf32>,
    } else {
    }
    %c0 = arith.constant 0 : index
    %c0_1 = arith.constant 0 : index
    %3 = vector.load %arg1[%c0, %c0_1] : memref<256x3xf32, #tpu.memory_space<vmem>>, vector<256x3xf32>
    %c0_2 = arith.constant 0 : index
    %c0_3 = arith.constant 0 : index
    %4 = vector.load %arg2[%c0_2, %c0_3] : memref<1x3xf32, #tpu.memory_space<vmem>>, vector<1x3xf32>
    %cst = arith.constant dense<0.000000e+00> : vector<3xf32>
    %5 = vector.multi_reduction <add>, %3, %cst [0] : vector<256x3xf32> to vector<3xf32>
    %6 = vector.shape_cast %5 : vector<3xf32> to vector<1x3xf32>
    %7 = arith.addf %4, %6 : vector<1x3xf32>
    %c0_4 = arith.constant 0 : index
    %c0_5 = arith.constant 0 : index
    %8 = vector.load %arg2[%c0_4, %c0_5] : memref<1x3xf32, #tpu.memory_space<vmem>>, vector<1x3xf32>
    tpu.vector_store %arg2[%c0_4, %c0_5], %7 {strides = array<i32>} : memref<1x3xf32, #tpu.memory_space<vmem>>, vector<1x3xf32>,
    return
  }
  func.func @transform_0(%arg0: i32) -> (i32, i32) {
    %c0_i32 = arith.constant 0 : i32
    %c0_i32_0 = arith.constant 0 : i32
    return %arg0, %c0_i32 : i32, i32
  }
  func.func @transform_1(%arg0: i32) -> (i32, i32) {
    %c0_i32 = arith.constant 0 : i32
    %c0_i32_0 = arith.constant 0 : i32
    %c0_i32_1 = arith.constant 0 : i32
    return %c0_i32, %c0_i32_0 : i32, i32
  }
}

module attributes {stable_mosaic.version = 11 : i64} {
  func.func @_xcov_kernel(%arg0: i32, %arg1: memref<1x3xf32, #tpu.memory_space<vmem>>, %arg2: memref<256x3xf32, #tpu.memory_space<vmem>>, %arg3: memref<3x3xf32, #tpu.memory_space<vmem>>) attributes {dimension_semantics = [#tpu.dimension_semantics<arbitrary>], iteration_bounds = array<i64: 1>, scalar_prefetch = 0 : i64, scratch_operands = 0 : i64, tpu.core_type = #tpu.core_type<tc>, window_params = [{pipeline_mode = #tpu.pipeline_mode<synchronous>, transform_indices = @transform_0, window_bounds = array<i64: 1, 3>}, {transform_indices = @transform_1, window_bounds = array<i64: 256, 3>}, {pipeline_mode = #tpu.pipeline_mode<synchronous>, transform_indices = @transform_2, window_bounds = array<i64: 3, 3>}]} {
    %c0_i32 = arith.constant 0 : i32
    %0 = arith.cmpi eq, %arg0, %c0_i32 : i32
    %1 = arith.extui %0 : i1 to i32
    %c0_i32_0 = arith.constant 0 : i32
    %2 = arith.cmpi ne, %1, %c0_i32_0 : i32
    scf.if %2 {
      %cst_8 = arith.constant 0.000000e+00 : f32
      %12 = vector.broadcast %cst_8 : f32 to vector<3x3xf32>
      %c0_9 = arith.constant 0 : index
      %c0_10 = arith.constant 0 : index
      %13 = vector.load %arg3[%c0_9, %c0_10] : memref<3x3xf32, #tpu.memory_space<vmem>>, vector<3x3xf32>
      tpu.vector_store %arg3[%c0_9, %c0_10], %12 {strides = array<i32>} : memref<3x3xf32, #tpu.memory_space<vmem>>, vector<3x3xf32>,
    } else {
    }
    %c0 = arith.constant 0 : index
    %c0_1 = arith.constant 0 : index
    %3 = vector.load %arg2[%c0, %c0_1] : memref<256x3xf32, #tpu.memory_space<vmem>>, vector<256x3xf32>
    %c0_2 = arith.constant 0 : index
    %c0_3 = arith.constant 0 : index
    %4 = vector.load %arg1[%c0_2, %c0_3] : memref<1x3xf32, #tpu.memory_space<vmem>>, vector<1x3xf32>
    %5 = vector.broadcast %4 : vector<1x3xf32> to vector<256x3xf32>
    %6 = arith.subf %3, %5 : vector<256x3xf32>
    %c0_4 = arith.constant 0 : index
    %c0_5 = arith.constant 0 : index
    %7 = vector.load %arg3[%c0_4, %c0_5] : memref<3x3xf32, #tpu.memory_space<vmem>>, vector<3x3xf32>
    %8 = tpu.transpose %6, [1, 0] : vector<256x3xf32> -> vector<3x256xf32>
    %cst = arith.constant dense<0.000000e+00> : vector<3x3xf32>
    %9 = tpu.matmul %8, %6, %cst {dimension_numbers = #tpu.dot_dimension_numbers<[1], [0], [0], [1], [0, 0, 1, 1], [], []>} : vector<3x256xf32>, vector<256x3xf32>, vector<3x3xf32> -> vector<3x3xf32>
    %10 = arith.addf %7, %9 : vector<3x3xf32>
    %c0_6 = arith.constant 0 : index
    %c0_7 = arith.constant 0 : index
    %11 = vector.load %arg3[%c0_6, %c0_7] : memref<3x3xf32, #tpu.memory_space<vmem>>, vector<3x3xf32>
    tpu.vector_store %arg3[%c0_6, %c0_7], %10 {strides = array<i32>} : memref<3x3xf32, #tpu.memory_space<vmem>>, vector<3x3xf32>,
    return
  }
  func.func @transform_0(%arg0: i32) -> (i32, i32) {
    %c0_i32 = arith.constant 0 : i32
    %c0_i32_0 = arith.constant 0 : i32
    %c0_i32_1 = arith.constant 0 : i32
    return %c0_i32, %c0_i32_0 : i32, i32
  }
  func.func @transform_1(%arg0: i32) -> (i32, i32) {
    %c0_i32 = arith.constant 0 : i32
    %c0_i32_0 = arith.constant 0 : i32
    return %arg0, %c0_i32 : i32, i32
  }
  func.func @transform_2(%arg0: i32) -> (i32, i32) {
    %c0_i32 = arith.constant 0 : i32
    %c0_i32_0 = arith.constant 0 : i32
    %c0_i32_1 = arith.constant 0 : i32
    return %c0_i32, %c0_i32_0 : i32, i32
  }
}

module attributes {stable_mosaic.version = 11 : i64} {
  func.func @_h2_stats_kernel(%arg0: i32, %arg1: memref<256x3xf32, #tpu.memory_space<vmem>>, %arg2: memref<36x4xf32, #tpu.memory_space<vmem>>, %arg3: memref<48x36xf32, #tpu.memory_space<vmem>>, %arg4: memref<48x2xf32, #tpu.memory_space<vmem>>) attributes {dimension_semantics = [#tpu.dimension_semantics<arbitrary>], iteration_bounds = array<i64: 1>, scalar_prefetch = 0 : i64, scratch_operands = 0 : i64, tpu.core_type = #tpu.core_type<tc>, window_params = [{transform_indices = @transform_0, window_bounds = array<i64: 256, 3>}, {pipeline_mode = #tpu.pipeline_mode<synchronous>, transform_indices = @transform_1, window_bounds = array<i64: 36, 4>}, {pipeline_mode = #tpu.pipeline_mode<synchronous>, transform_indices = @transform_2, window_bounds = array<i64: 48, 36>}, {pipeline_mode = #tpu.pipeline_mode<synchronous>, transform_indices = @transform_3, window_bounds = array<i64: 48, 2>}]} {
    %c0_i32 = arith.constant 0 : i32
    %0 = arith.cmpi eq, %arg0, %c0_i32 : i32
    %1 = arith.extui %0 : i1 to i32
    %c0_i32_0 = arith.constant 0 : i32
    %2 = arith.cmpi ne, %1, %c0_i32_0 : i32
    scf.if %2 {
      %cst_15 = arith.constant 0.000000e+00 : f32
      %23 = vector.broadcast %cst_15 : f32 to vector<48x2xf32>
      %c0_16 = arith.constant 0 : index
      %c0_17 = arith.constant 0 : index
      %24 = vector.load %arg4[%c0_16, %c0_17] : memref<48x2xf32, #tpu.memory_space<vmem>>, vector<48x2xf32>
      tpu.vector_store %arg4[%c0_16, %c0_17], %23 {strides = array<i32>} : memref<48x2xf32, #tpu.memory_space<vmem>>, vector<48x2xf32>,
    } else {
    }
    %c0 = arith.constant 0 : index
    %c0_1 = arith.constant 0 : index
    %3 = vector.load %arg1[%c0, %c0_1] : memref<256x3xf32, #tpu.memory_space<vmem>>, vector<256x3xf32>
    %4 = tpu.transpose %3, [1, 0] : vector<256x3xf32> -> vector<3x256xf32>
    %c0_2 = arith.constant 0 : index
    %c0_3 = arith.constant 0 : index
    %5 = vector.load %arg2[%c0_2, %c0_3] : memref<36x4xf32, #tpu.memory_space<vmem>>, vector<36x3xf32>
    %cst = arith.constant dense<0.000000e+00> : vector<36x256xf32>
    %6 = tpu.matmul %5, %4, %cst {dimension_numbers = #tpu.dot_dimension_numbers<[1], [0], [0], [1], [0, 0, 1, 1], [], []>} : vector<36x3xf32>, vector<3x256xf32>, vector<36x256xf32> -> vector<36x256xf32>
    %c0_4 = arith.constant 0 : index
    %c3 = arith.constant 3 : index
    %7 = vector.load %arg2[%c0_4, %c3] : memref<36x4xf32, #tpu.memory_space<vmem>>, vector<36x1xf32>
    %8 = vector.broadcast %7 : vector<36x1xf32> to vector<36x256xf32>
    %9 = arith.addf %6, %8 : vector<36x256xf32>
    %cst_5 = arith.constant 0.000000e+00 : f32
    %10 = vector.broadcast %cst_5 : f32 to vector<36x256xf32>
    %11 = arith.maximumf %9, %10 : vector<36x256xf32>
    %c0_6 = arith.constant 0 : index
    %c0_7 = arith.constant 0 : index
    %12 = vector.load %arg3[%c0_6, %c0_7] : memref<48x36xf32, #tpu.memory_space<vmem>>, vector<48x36xf32>
    %cst_8 = arith.constant dense<0.000000e+00> : vector<48x256xf32>
    %13 = tpu.matmul %12, %11, %cst_8 {dimension_numbers = #tpu.dot_dimension_numbers<[1], [0], [0], [1], [0, 0, 1, 1], [], []>} : vector<48x36xf32>, vector<36x256xf32>, vector<48x256xf32> -> vector<48x256xf32>
    %cst_9 = arith.constant dense<0.000000e+00> : vector<48xf32>
    %14 = vector.multi_reduction <add>, %13, %cst_9 [1] : vector<48x256xf32> to vector<48xf32>
    %15 = vector.shape_cast %14 : vector<48xf32> to vector<48x1xf32>
    %16 = arith.mulf %13, %13 : vector<48x256xf32>
    %cst_10 = arith.constant dense<0.000000e+00> : vector<48xf32>
    %17 = vector.multi_reduction <add>, %16, %cst_10 [1] : vector<48x256xf32> to vector<48xf32>
    %18 = vector.shape_cast %17 : vector<48xf32> to vector<48x1xf32>
    %c0_11 = arith.constant 0 : index
    %c0_12 = arith.constant 0 : index
    %19 = vector.load %arg4[%c0_11, %c0_12] : memref<48x2xf32, #tpu.memory_space<vmem>>, vector<48x2xf32>
    %20 = tpu.concatenate %15, %18 in 1 : vector<48x1xf32>, vector<48x1xf32> -> vector<48x2xf32>
    %21 = arith.addf %19, %20 : vector<48x2xf32>
    %c0_13 = arith.constant 0 : index
    %c0_14 = arith.constant 0 : index
    %22 = vector.load %arg4[%c0_13, %c0_14] : memref<48x2xf32, #tpu.memory_space<vmem>>, vector<48x2xf32>
    tpu.vector_store %arg4[%c0_13, %c0_14], %21 {strides = array<i32>} : memref<48x2xf32, #tpu.memory_space<vmem>>, vector<48x2xf32>,
    return
  }
  func.func @transform_0(%arg0: i32) -> (i32, i32) {
    %c0_i32 = arith.constant 0 : i32
    %c0_i32_0 = arith.constant 0 : i32
    return %arg0, %c0_i32 : i32, i32
  }
  func.func @transform_1(%arg0: i32) -> (i32, i32) {
    %c0_i32 = arith.constant 0 : i32
    %c0_i32_0 = arith.constant 0 : i32
    %c0_i32_1 = arith.constant 0 : i32
    return %c0_i32, %c0_i32_0 : i32, i32
  }
  func.func @transform_2(%arg0: i32) -> (i32, i32) {
    %c0_i32 = arith.constant 0 : i32
    %c0_i32_0 = arith.constant 0 : i32
    %c0_i32_1 = arith.constant 0 : i32
    return %c0_i32, %c0_i32_0 : i32, i32
  }
  func.func @transform_3(%arg0: i32) -> (i32, i32) {
    %c0_i32 = arith.constant 0 : i32
    %c0_i32_0 = arith.constant 0 : i32
    %c0_i32_1 = arith.constant 0 : i32
    return %c0_i32, %c0_i32_0 : i32, i32
  }
}

module attributes {stable_mosaic.version = 11 : i64} {
  func.func @_apply_kernel(%arg0: i32, %arg1: memref<256x3xf32, #tpu.memory_space<vmem>>, %arg2: memref<36x4xf32, #tpu.memory_space<vmem>>, %arg3: memref<48x37xf32, #tpu.memory_space<vmem>>, %arg4: memref<24x49xf32, #tpu.memory_space<vmem>>, %arg5: memref<256x24xf32, #tpu.memory_space<vmem>>) attributes {dimension_semantics = [#tpu.dimension_semantics<parallel>], iteration_bounds = array<i64: 1>, scalar_prefetch = 0 : i64, scratch_operands = 0 : i64, tpu.core_type = #tpu.core_type<tc>, window_params = [{transform_indices = @transform_0, window_bounds = array<i64: 256, 3>}, {pipeline_mode = #tpu.pipeline_mode<synchronous>, transform_indices = @transform_1, window_bounds = array<i64: 36, 4>}, {pipeline_mode = #tpu.pipeline_mode<synchronous>, transform_indices = @transform_2, window_bounds = array<i64: 48, 37>}, {pipeline_mode = #tpu.pipeline_mode<synchronous>, transform_indices = @transform_3, window_bounds = array<i64: 24, 49>}, {transform_indices = @transform_4, window_bounds = array<i64: 256, 24>}]} {
    %c0 = arith.constant 0 : index
    %c0_0 = arith.constant 0 : index
    %0 = vector.load %arg1[%c0, %c0_0] : memref<256x3xf32, #tpu.memory_space<vmem>>, vector<256x3xf32>
    %1 = tpu.transpose %0, [1, 0] : vector<256x3xf32> -> vector<3x256xf32>
    %c0_1 = arith.constant 0 : index
    %c0_2 = arith.constant 0 : index
    %2 = vector.load %arg2[%c0_1, %c0_2] : memref<36x4xf32, #tpu.memory_space<vmem>>, vector<36x3xf32>
    %cst = arith.constant dense<0.000000e+00> : vector<36x256xf32>
    %3 = tpu.matmul %2, %1, %cst {dimension_numbers = #tpu.dot_dimension_numbers<[1], [0], [0], [1], [0, 0, 1, 1], [], []>} : vector<36x3xf32>, vector<3x256xf32>, vector<36x256xf32> -> vector<36x256xf32>
    %c0_3 = arith.constant 0 : index
    %c3 = arith.constant 3 : index
    %4 = vector.load %arg2[%c0_3, %c3] : memref<36x4xf32, #tpu.memory_space<vmem>>, vector<36x1xf32>
    %5 = vector.broadcast %4 : vector<36x1xf32> to vector<36x256xf32>
    %6 = arith.addf %3, %5 : vector<36x256xf32>
    %cst_4 = arith.constant 0.000000e+00 : f32
    %7 = vector.broadcast %cst_4 : f32 to vector<36x256xf32>
    %8 = arith.maximumf %6, %7 : vector<36x256xf32>
    %c0_5 = arith.constant 0 : index
    %c0_6 = arith.constant 0 : index
    %9 = vector.load %arg3[%c0_5, %c0_6] : memref<48x37xf32, #tpu.memory_space<vmem>>, vector<48x36xf32>
    %cst_7 = arith.constant dense<0.000000e+00> : vector<48x256xf32>
    %10 = tpu.matmul %9, %8, %cst_7 {dimension_numbers = #tpu.dot_dimension_numbers<[1], [0], [0], [1], [0, 0, 1, 1], [], []>} : vector<48x36xf32>, vector<36x256xf32>, vector<48x256xf32> -> vector<48x256xf32>
    %c0_8 = arith.constant 0 : index
    %c36 = arith.constant 36 : index
    %11 = vector.load %arg3[%c0_8, %c36] : memref<48x37xf32, #tpu.memory_space<vmem>>, vector<48x1xf32>
    %12 = vector.broadcast %11 : vector<48x1xf32> to vector<48x256xf32>
    %13 = arith.addf %10, %12 : vector<48x256xf32>
    %cst_9 = arith.constant 0.000000e+00 : f32
    %14 = vector.broadcast %cst_9 : f32 to vector<48x256xf32>
    %15 = arith.maximumf %13, %14 : vector<48x256xf32>
    %c0_10 = arith.constant 0 : index
    %c0_11 = arith.constant 0 : index
    %16 = vector.load %arg4[%c0_10, %c0_11] : memref<24x49xf32, #tpu.memory_space<vmem>>, vector<24x48xf32>
    %cst_12 = arith.constant dense<0.000000e+00> : vector<24x256xf32>
    %17 = tpu.matmul %16, %15, %cst_12 {dimension_numbers = #tpu.dot_dimension_numbers<[1], [0], [0], [1], [0, 0, 1, 1], [], []>} : vector<24x48xf32>, vector<48x256xf32>, vector<24x256xf32> -> vector<24x256xf32>
    %c0_13 = arith.constant 0 : index
    %c48 = arith.constant 48 : index
    %18 = vector.load %arg4[%c0_13, %c48] : memref<24x49xf32, #tpu.memory_space<vmem>>, vector<24x1xf32>
    %19 = vector.broadcast %18 : vector<24x1xf32> to vector<24x256xf32>
    %20 = arith.addf %17, %19 : vector<24x256xf32>
    %cst_14 = arith.constant 0.000000e+00 : f32
    %21 = vector.broadcast %cst_14 : f32 to vector<24x256xf32>
    %22 = arith.maximumf %20, %21 : vector<24x256xf32>
    %23 = tpu.transpose %22, [1, 0] : vector<24x256xf32> -> vector<256x24xf32>
    %c0_15 = arith.constant 0 : index
    %c0_16 = arith.constant 0 : index
    %24 = vector.load %arg5[%c0_15, %c0_16] : memref<256x24xf32, #tpu.memory_space<vmem>>, vector<256x24xf32>
    tpu.vector_store %arg5[%c0_15, %c0_16], %23 {strides = array<i32>} : memref<256x24xf32, #tpu.memory_space<vmem>>, vector<256x24xf32>,
    return
  }
  func.func @transform_0(%arg0: i32) -> (i32, i32) {
    %c0_i32 = arith.constant 0 : i32
    %c0_i32_0 = arith.constant 0 : i32
    return %arg0, %c0_i32 : i32, i32
  }
  func.func @transform_1(%arg0: i32) -> (i32, i32) {
    %c0_i32 = arith.constant 0 : i32
    %c0_i32_0 = arith.constant 0 : i32
    %c0_i32_1 = arith.constant 0 : i32
    return %c0_i32, %c0_i32_0 : i32, i32
  }
  func.func @transform_2(%arg0: i32) -> (i32, i32) {
    %c0_i32 = arith.constant 0 : i32
    %c0_i32_0 = arith.constant 0 : i32
    %c0_i32_1 = arith.constant 0 : i32
    return %c0_i32, %c0_i32_0 : i32, i32
  }
  func.func @transform_3(%arg0: i32) -> (i32, i32) {
    %c0_i32 = arith.constant 0 : i32
    %c0_i32_0 = arith.constant 0 : i32
    %c0_i32_1 = arith.constant 0 : i32
    return %c0_i32, %c0_i32_0 : i32, i32
  }
  func.func @transform_4(%arg0: i32) -> (i32, i32) {
    %c0_i32 = arith.constant 0 : i32
    %c0_i32_0 = arith.constant 0 : i32
    return %arg0, %c0_i32 : i32, i32
  }
}

</mosaic_0001>

<llo_original>
// kernel: bp_model_forward.4
$region0: #{bp_model_forward.4}
  #allocation0 [shape = 'u32[]', space=smem, size = 0x4, offset = 0x4, fixed_abs, tag = 'smem constant byte address 0x4 - core index']
  #allocation1 [shape = 'u32[144,128]{1,0:T(1,128)}', space=vmem, size = 0x12000, scoped, tag = 'internal scratch']
  %s0 = inlined_call_operand.vmem [shape: f32[256,3], index: 0, kind: input, shape index: {}]
  %s1 = inlined_call_operand.vmem [shape: f32[1,3], index: 1, kind: output, shape index: {}]
  %s2 = sld [smem:[#allocation0]]
  $region18: #{bp_model_forward.4} parent=0
    _
  %s4 = ssub.s32 1, %s2
  %s5 = scalar_select 0, %s4, %s2
  // Predicated region
  $region2: #{bp_model_forward.4} parent=0 // pred_check
    _
  $region3: #{bp_model_forward.4} parent=0 // pred_check_branch
    %7 = sbr.rel (0) target = $region5
  $region4: #{bp_model_forward.4} parent=0 // pred_region
    _
  $region5: #{bp_model_forward.4} parent=0 // pred_fallthru
    _
  %p8 = scmp.eq.s32.totalorder 0, 0
  // Predicated region
  $region6: #{bp_model_forward.4} parent=0 // pred_check
    %p9 = pneg %p8
  $region7: #{bp_model_forward.4} parent=0 // pred_check_branch
    %11 = sbr.rel (%p9) target = $region9
  $region8: #{bp_model_forward.4} parent=0 // pred_region
    %vm12 = vcmask 16384
    %13 = vst.msk [vmem:[%s1] sm:$0x1] %vm12, 0.0
  $region9: #{bp_model_forward.4} parent=0 // pred_fallthru
    _
  %v14 = vld [vmem:[%s0] sm:$0xff]
  %v15 = vld [vmem:[%s0 + $0x8] sm:$0xff]
  %v16 = vld [vmem:[%s0 + $0x10] sm:$0xff]
  %v17 = vld [vmem:[%s0 + $0x18] sm:$0xff]
  %v18 = vld [vmem:[%s0 + $0x20] sm:$0xff]
  %v19 = vld [vmem:[%s0 + $0x28] sm:$0xff]
  %v20 = vld [vmem:[%s0 + $0x30] sm:$0xff]
  %v21 = vld [vmem:[%s0 + $0x38] sm:$0xff]
  %v22 = vld [vmem:[%s0 + $0x40] sm:$0xff]
  %v23 = vld [vmem:[%s0 + $0x48] sm:$0xff]
  %v24 = vld [vmem:[%s0 + $0x50] sm:$0xff]
  %v25 = vld [vmem:[%s0 + $0x58] sm:$0xff]
  %v26 = vld [vmem:[%s0 + $0x60] sm:$0xff]
  %v27 = vld [vmem:[%s0 + $0x68] sm:$0xff]
  %v28 = vld [vmem:[%s0 + $0x70] sm:$0xff]
  %v29 = vld [vmem:[%s0 + $0x78] sm:$0xff]
  %v30 = vld [vmem:[%s0 + $0x80] sm:$0xff]
  %v31 = vld [vmem:[%s0 + $0x88] sm:$0xff]
  %v32 = vld [vmem:[%s0 + $0x90] sm:$0xff]
  %v33 = vld [vmem:[%s0 + $0x98] sm:$0xff]
  %v34 = vld [vmem:[%s0 + $0xa0] sm:$0xff]
  %v35 = vld [vmem:[%s0 + $0xa8] sm:$0xff]
  %v36 = vld [vmem:[%s0 + $0xb0] sm:$0xff]
  %v37 = vld [vmem:[%s0 + $0xb8] sm:$0xff]
  %v38 = vld [vmem:[%s0 + $0xc0] sm:$0xff]
  %v39 = vld [vmem:[%s0 + $0xc8] sm:$0xff]
  %v40 = vld [vmem:[%s0 + $0xd0] sm:$0xff]
  %v41 = vld [vmem:[%s0 + $0xd8] sm:$0xff]
  %v42 = vld [vmem:[%s0 + $0xe0] sm:$0xff]
  %v43 = vld [vmem:[%s0 + $0xe8] sm:$0xff]
  %v44 = vld [vmem:[%s0 + $0xf0] sm:$0xff]
  %v45 = vld [vmem:[%s0 + $0xf8] sm:$0xff]
  %v46 = vld [vmem:[%s1] sm:$0x1]
  %vm47 = vcmask 23552
  %v48 = vsel %vm47, %v14, 0.0
  %v49 = vsel %vm47, %v15, 0.0
  %v50 = vadd.f32 %v48, %v49
  %v51 = vsel %vm47, %v16, 0.0
  %v52 = vadd.f32 %v50, %v51
  %v53 = vsel %vm47, %v17, 0.0
  %v54 = vadd.f32 %v52, %v53
  %v55 = vsel %vm47, %v18, 0.0
  %v56 = vadd.f32 %v54, %v55
  %v57 = vsel %vm47, %v19, 0.0
  %v58 = vadd.f32 %v56, %v57
  %v59 = vsel %vm47, %v20, 0.0
  %v60 = vadd.f32 %v58, %v59
  %v61 = vsel %vm47, %v21, 0.0
  %v62 = vadd.f32 %v60, %v61
  %v63 = vsel %vm47, %v22, 0.0
  %v64 = vadd.f32 %v62, %v63
  %v65 = vsel %vm47, %v23, 0.0
  %v66 = vadd.f32 %v64, %v65
  %v67 = vsel %vm47, %v24, 0.0
  %v68 = vadd.f32 %v66, %v67
  %v69 = vsel %vm47, %v25, 0.0
  %v70 = vadd.f32 %v68, %v69
  %v71 = vsel %vm47, %v26, 0.0
  %v72 = vadd.f32 %v70, %v71
  %v73 = vsel %vm47, %v27, 0.0
  %v74 = vadd.f32 %v72, %v73
  %v75 = vsel %vm47, %v28, 0.0
  %v76 = vadd.f32 %v74, %v75
  %v77 = vsel %vm47, %v29, 0.0
  %v78 = vadd.f32 %v76, %v77
  %v79 = vsel %vm47, %v30, 0.0
  %v80 = vadd.f32 %v78, %v79
  %v81 = vsel %vm47, %v31, 0.0
  %v82 = vadd.f32 %v80, %v81
  %v83 = vsel %vm47, %v32, 0.0
  %v84 = vadd.f32 %v82, %v83
  %v85 = vsel %vm47, %v33, 0.0
  %v86 = vadd.f32 %v84, %v85
  %v87 = vsel %vm47, %v34, 0.0
  %v88 = vadd.f32 %v86, %v87
  %v89 = vsel %vm47, %v35, 0.0
  %v90 = vadd.f32 %v88, %v89
  %v91 = vsel %vm47, %v36, 0.0
  %v92 = vadd.f32 %v90, %v91
  %v93 = vsel %vm47, %v37, 0.0
  %v94 = vadd.f32 %v92, %v93
  %v95 = vsel %vm47, %v38, 0.0
  %v96 = vadd.f32 %v94, %v95
  %v97 = vsel %vm47, %v39, 0.0
  %v98 = vadd.f32 %v96, %v97
  %v99 = vsel %vm47, %v40, 0.0
  %v100 = vadd.f32 %v98, %v99
  %v101 = vsel %vm47, %v41, 0.0
  %v102 = vadd.f32 %v100, %v101
  %v103 = vsel %vm47, %v42, 0.0
  %v104 = vadd.f32 %v102, %v103
  %v105 = vsel %vm47, %v43, 0.0
  %v106 = vadd.f32 %v104, %v105
  %v107 = vsel %vm47, %v44, 0.0
  %v108 = vadd.f32 %v106, %v107
  %v109 = vsel %vm47, %v45, 0.0
  %v110 = vadd.f32 %v108, %v109
  %v111 = vrot.slane %v110, 4
  %v112 = vadd.f32 %v110, %v111
  %v113 = vrot.slane %v112, 2
  %v114 = vadd.f32 %v112, %v113
  %v115 = vrot.slane %v114, 1
  %v116 = vadd.f32 %v114, %v115
  %v117 = vadd.f32 %v46, %v116
  %vm118 = vcmask 16384
  %119 = vst.msk [vmem:[%s1] sm:$0x1] %vm118, %v117
  // Predicated region
  $region10: #{bp_model_forward.4} parent=0 // pred_check
    _
  $region11: #{bp_model_forward.4} parent=0 // pred_check_branch
    %121 = sbr.rel (0) target = $region13
  $region12: #{bp_model_forward.4} parent=0 // pred_region
    _
  $region13: #{bp_model_forward.4} parent=0 // pred_fallthru
    _
  // Predicated region
  $region14: #{bp_model_forward.4} parent=0 // pred_check
    _
  $region15: #{bp_model_forward.4} parent=0 // pred_check_branch
    %123 = sbr.rel (0) target = $region17
  $region16: #{bp_model_forward.4} parent=0 // pred_region
    _
  $region17: #{bp_model_forward.4} parent=0 // pred_fallthru
    _

// kernel: bp_model_forward.5
$region0: #{bp_model_forward.5}
  #allocation0 [shape = 'u32[]', space=smem, size = 0x4, offset = 0x4, fixed_abs, tag = 'smem constant byte address 0x4 - core index']
  #allocation1 [shape = 'u32[144,128]{1,0:T(1,128)}', space=vmem, size = 0x12000, scoped, tag = 'internal scratch']
  %s0 = inlined_call_operand.vmem [shape: f32[1,3], index: 0, kind: input, shape index: {}]
  %s1 = inlined_call_operand.vmem [shape: f32[256,3], index: 1, kind: input, shape index: {}]
  %s2 = inlined_call_operand.vmem [shape: f32[3,3], index: 2, kind: output, shape index: {}]
  %s3 = sld [smem:[#allocation0]]
  $region22: #{bp_model_forward.5} parent=0
    _
  %s5 = ssub.s32 1, %s3
  %s6 = scalar_select 0, %s5, %s3
  // Predicated region
  $region2: #{bp_model_forward.5} parent=0 // pred_check
    _
  $region3: #{bp_model_forward.5} parent=0 // pred_check_branch
    %8 = sbr.rel (0) target = $region5
  $region4: #{bp_model_forward.5} parent=0 // pred_region
    _
  $region5: #{bp_model_forward.5} parent=0 // pred_fallthru
    _
  // Predicated region
  $region6: #{bp_model_forward.5} parent=0 // pred_check
    _
  $region7: #{bp_model_forward.5} parent=0 // pred_check_branch
    %10 = sbr.rel (0) target = $region9
  $region8: #{bp_model_forward.5} parent=0 // pred_region
    _
  $region9: #{bp_model_forward.5} parent=0 // pred_fallthru
    _
  %p11 = scmp.eq.s32.totalorder 0, 0
  // Predicated region
  $region10: #{bp_model_forward.5} parent=0 // pred_check
    %p12 = pneg %p11
  $region11: #{bp_model_forward.5} parent=0 // pred_check_branch
    %14 = sbr.rel (%p12) target = $region13
  $region12: #{bp_model_forward.5} parent=0 // pred_region
    %vm15 = vcmask 18432
    %16 = vst.msk [vmem:[%s2] sm:$0x7] %vm15, 0.0
  $region13: #{bp_model_forward.5} parent=0 // pred_fallthru
    _
  %v17 = vld [vmem:[%s1] sm:$0xff]
  %v18 = vld [vmem:[%s1 + $0x8] sm:$0xff]
  %v19 = vld [vmem:[%s1 + $0x10] sm:$0xff]
  %v20 = vld [vmem:[%s1 + $0x18] sm:$0xff]
  %v21 = vld [vmem:[%s1 + $0x20] sm:$0xff]
  %v22 = vld [vmem:[%s1 + $0x28] sm:$0xff]
  %v23 = vld [vmem:[%s1 + $0x30] sm:$0xff]
  %v24 = vld [vmem:[%s1 + $0x38] sm:$0xff]
  %v25 = vld [vmem:[%s1 + $0x40] sm:$0xff]
  %v26 = vld [vmem:[%s1 + $0x48] sm:$0xff]
  %v27 = vld [vmem:[%s1 + $0x50] sm:$0xff]
  %v28 = vld [vmem:[%s1 + $0x58] sm:$0xff]
  %v29 = vld [vmem:[%s1 + $0x60] sm:$0xff]
  %v30 = vld [vmem:[%s1 + $0x68] sm:$0xff]
  %v31 = vld [vmem:[%s1 + $0x70] sm:$0xff]
  %v32 = vld [vmem:[%s1 + $0x78] sm:$0xff]
  %v33 = vld [vmem:[%s1 + $0x80] sm:$0xff]
  %v34 = vld [vmem:[%s1 + $0x88] sm:$0xff]
  %v35 = vld [vmem:[%s1 + $0x90] sm:$0xff]
  %v36 = vld [vmem:[%s1 + $0x98] sm:$0xff]
  %v37 = vld [vmem:[%s1 + $0xa0] sm:$0xff]
  %v38 = vld [vmem:[%s1 + $0xa8] sm:$0xff]
  %v39 = vld [vmem:[%s1 + $0xb0] sm:$0xff]
  %v40 = vld [vmem:[%s1 + $0xb8] sm:$0xff]
  %v41 = vld [vmem:[%s1 + $0xc0] sm:$0xff]
  %v42 = vld [vmem:[%s1 + $0xc8] sm:$0xff]
  %v43 = vld [vmem:[%s1 + $0xd0] sm:$0xff]
  %v44 = vld [vmem:[%s1 + $0xd8] sm:$0xff]
  %v45 = vld [vmem:[%s1 + $0xe0] sm:$0xff]
  %v46 = vld [vmem:[%s1 + $0xe8] sm:$0xff]
  %v47 = vld [vmem:[%s1 + $0xf0] sm:$0xff]
  %v48 = vld [vmem:[%s1 + $0xf8] sm:$0xff]
  %v49 = vld [vmem:[%s0] sm:$0x1]
  %v51 = vlaneseq
  %v52 = vshrl.u32 %v51, 7
  %v53 = vsub.s32 0, %v52
  %v54 = vrot.slane %v49, %v53
  %v56 = vsub.f32 %v17, %v54
  %v57 = vsub.f32 %v18, %v54
  %v58 = vsub.f32 %v19, %v54
  %v59 = vsub.f32 %v20, %v54
  %v60 = vsub.f32 %v21, %v54
  %v61 = vsub.f32 %v22, %v54
  %v62 = vsub.f32 %v23, %v54
  %v63 = vsub.f32 %v24, %v54
  %v64 = vsub.f32 %v25, %v54
  %v65 = vsub.f32 %v26, %v54
  %v66 = vsub.f32 %v27, %v54
  %v67 = vsub.f32 %v28, %v54
  %v68 = vsub.f32 %v29, %v54
  %v69 = vsub.f32 %v30, %v54
  %v70 = vsub.f32 %v31, %v54
  %v71 = vsub.f32 %v32, %v54
  %v72 = vsub.f32 %v33, %v54
  %v73 = vsub.f32 %v34, %v54
  %v74 = vsub.f32 %v35, %v54
  %v75 = vsub.f32 %v36, %v54
  %v76 = vsub.f32 %v37, %v54
  %v77 = vsub.f32 %v38, %v54
  %v78 = vsub.f32 %v39, %v54
  %v79 = vsub.f32 %v40, %v54
  %v80 = vsub.f32 %v41, %v54
  %v81 = vsub.f32 %v42, %v54
  %v82 = vsub.f32 %v43, %v54
  %v83 = vsub.f32 %v44, %v54
  %v84 = vsub.f32 %v45, %v54
  %v85 = vsub.f32 %v46, %v54
  %v86 = vsub.f32 %v47, %v54
  %v87 = vsub.f32 %v48, %v54
  %v88 = vld [vmem:[%s2] sm:$0x7]
  %89 = vxpose.xlu0.b32.start [1/16] %v56, 128
  %90 = vxpose.xlu0.b32.cont [2/16] %v57, 128
  %91 = vxpose.xlu0.b32.cont [3/16] %v58, 128
  %92 = vxpose.xlu0.b32.cont [4/16] %v59, 128
  %93 = vxpose.xlu0.b32.cont [5/16] %v60, 128
  %94 = vxpose.xlu0.b32.cont [6/16] %v61, 128
  %95 = vxpose.xlu0.b32.cont [7/16] %v62, 128
  %96 = vxpose.xlu0.b32.cont [8/16] %v63, 128
  %97 = vxpose.xlu0.b32.cont [9/16] %v64, 128
  %98 = vxpose.xlu0.b32.cont [10/16] %v65, 128
  %99 = vxpose.xlu0.b32.cont [11/16] %v66, 128
  %100 = vxpose.xlu0.b32.cont [12/16] %v67, 128
  %101 = vxpose.xlu0.b32.cont [13/16] %v68, 128
  %102 = vxpose.xlu0.b32.cont [14/16] %v69, 128
  %103 = vxpose.xlu0.b32.cont [15/16] %v70, 128
  %104 = vxpose.xlu0.b32.end [16/16] %v71, 128
  %v105 = vpop.trf.xlu0
  %v106 = vpop.trf.xlu0
  %v107 = vpop.trf.xlu0
  %v108 = vpop.trf.xlu0
  %v109 = vpop.trf.xlu0
  %v110 = vpop.trf.xlu0
  %v111 = vpop.trf.xlu0
  %v112 = vpop.trf.xlu0
  %v113 = vpop.trf.xlu0
  %v114 = vpop.trf.xlu0
  %v115 = vpop.trf.xlu0
  %v116 = vpop.trf.xlu0
  %v117 = vpop.trf.xlu0
  %v118 = vpop.trf.xlu0
  %v119 = vpop.trf.xlu0
  %v120 = vpop.trf.xlu0
  %121 = vxpose.xlu0.b32.start [1/16] %v72, 128
  %122 = vxpose.xlu0.b32.cont [2/16] %v73, 128
  %123 = vxpose.xlu0.b32.cont [3/16] %v74, 128
  %124 = vxpose.xlu0.b32.cont [4/16] %v75, 128
  %125 = vxpose.xlu0.b32.cont [5/16] %v76, 128
  %126 = vxpose.xlu0.b32.cont [6/16] %v77, 128
  %127 = vxpose.xlu0.b32.cont [7/16] %v78, 128
  %128 = vxpose.xlu0.b32.cont [8/16] %v79, 128
  %129 = vxpose.xlu0.b32.cont [9/16] %v80, 128
  %130 = vxpose.xlu0.b32.cont [10/16] %v81, 128
  %131 = vxpose.xlu0.b32.cont [11/16] %v82, 128
  %132 = vxpose.xlu0.b32.cont [12/16] %v83, 128
  %133 = vxpose.xlu0.b32.cont [13/16] %v84, 128
  %134 = vxpose.xlu0.b32.cont [14/16] %v85, 128
  %135 = vxpose.xlu0.b32.cont [15/16] %v86, 128
  %136 = vxpose.xlu0.b32.end [16/16] %v87, 128
  %v137 = vpop.trf.xlu0
  %v138 = vpop.trf.xlu0
  %v139 = vpop.trf.xlu0
  %v140 = vpop.trf.xlu0
  %v141 = vpop.trf.xlu0
  %v142 = vpop.trf.xlu0
  %v143 = vpop.trf.xlu0
  %v144 = vpop.trf.xlu0
  %v145 = vpop.trf.xlu0
  %v146 = vpop.trf.xlu0
  %v147 = vpop.trf.xlu0
  %v148 = vpop.trf.xlu0
  %v149 = vpop.trf.xlu0
  %v150 = vpop.trf.xlu0
  %v151 = vpop.trf.xlu0
  %v152 = vpop.trf.xlu0
  %153 = vmatprep.subr.mxu0 0.0
  %154 = vmatpush1.msra.mxu0 %v71
  %155 = vmatprep.subr.mxu0 0.0
  %156 = vmatpush1.msra.mxu0 %v70
  %157 = vmatprep.subr.mxu0 0.0
  %158 = vmatpush1.msra.mxu0 %v69
  %159 = vmatprep.subr.mxu0 0.0
  %160 = vmatpush1.msra.mxu0 %v68
  %161 = vmatprep.subr.mxu0 0.0
  %162 = vmatpush1.msra.mxu0 %v67
  %163 = vmatprep.subr.mxu0 0.0
  %164 = vmatpush1.msra.mxu0 %v66
  %165 = vmatprep.subr.mxu0 0.0
  %166 = vmatpush1.msra.mxu0 %v65
  %167 = vmatprep.subr.mxu0 0.0
  %168 = vmatpush1.msra.mxu0 %v64
  %169 = vmatprep.subr.mxu0 0.0
  %170 = vmatpush1.msra.mxu0 %v63
  %171 = vmatprep.subr.mxu0 0.0
  %172 = vmatpush1.msra.mxu0 %v62
  %173 = vmatprep.subr.mxu0 0.0
  %174 = vmatpush1.msra.mxu0 %v61
  %175 = vmatprep.subr.mxu0 0.0
  %176 = vmatpush1.msra.mxu0 %v60
  %177 = vmatprep.subr.mxu0 0.0
  %178 = vmatpush1.msra.mxu0 %v59
  %179 = vmatprep.subr.mxu0 0.0
  %180 = vmatpush1.msra.mxu0 %v58
  %181 = vmatprep.subr.mxu0 0.0
  %182 = vmatpush1.msra.mxu0 %v57
  %183 = vmatprep.subr.mxu0 0.0
  %184 = vmatpush1.msra.mxu0 %v56
  %185 = vmatprep.subr.mxu0 0.0
  %186 = vmatpush2.msra.mxu0 %v87
  %187 = vmatprep.subr.mxu0 0.0
  %188 = vmatpush2.msra.mxu0 %v86
  %189 = vmatprep.subr.mxu0 0.0
  %190 = vmatpush2.msra.mxu0 %v85
  %191 = vmatprep.subr.mxu0 0.0
  %192 = vmatpush2.msra.mxu0 %v84
  %193 = vmatprep.subr.mxu0 0.0
  %194 = vmatpush2.msra.mxu0 %v83
  %195 = vmatprep.subr.mxu0 0.0
  %196 = vmatpush2.msra.mxu0 %v82
  %197 = vmatprep.subr.mxu0 0.0
  %198 = vmatpush2.msra.mxu0 %v81
  %199 = vmatprep.subr.mxu0 0.0
  %200 = vmatpush2.msra.mxu0 %v80
  %201 = vmatprep.subr.mxu0 0.0
  %202 = vmatpush2.msra.mxu0 %v79
  %203 = vmatprep.subr.mxu0 0.0
  %204 = vmatpush2.msra.mxu0 %v78
  %205 = vmatprep.subr.mxu0 0.0
  %206 = vmatpush2.msra.mxu0 %v77
  %207 = vmatprep.subr.mxu0 0.0
  %208 = vmatpush2.msra.mxu0 %v76
  %209 = vmatprep.subr.mxu0 0.0
  %210 = vmatpush2.msra.mxu0 %v75
  %211 = vmatprep.subr.mxu0 0.0
  %212 = vmatpush2.msra.mxu0 %v74
  %213 = vmatprep.subr.mxu0 0.0
  %214 = vmatpush2.msra.mxu0 %v73
  %215 = vmatprep.subr.mxu0 0.0
  %216 = vmatpush2.msra.mxu0 %v72
  %217 = vmatprep.mubr.f32.mxu0 %v137
  %218 = vmatmul.mubr.f32.gmra.mxu0 %v105
  %v219 = vpop.f32.mrf.mxu0
  %v220 = vadd.f32 0.0, %v219
  %v221 = vpop.f32.mrf.mxu0
  %222 = vdwg.mxu0
  %v223 = vadd.f32 %v88, %v220
  %vm224 = vcmask 18432
  %225 = vst.msk [vmem:[%s2] sm:$0x7] %vm224, %v223
  // Predicated region
  $region14: #{bp_model_forward.5} parent=0 // pred_check
    _
  $region15: #{bp_model_forward.5} parent=0 // pred_check_branch
    %227 = sbr.rel (0) target = $region17
  $region16: #{bp_model_forward.5} parent=0 // pred_region
    _
  $region17: #{bp_model_forward.5} parent=0 // pred_fallthru
    _
  // Predicated region
  $region18: #{bp_model_forward.5} parent=0 // pred_check
    _
  $region19: #{bp_model_forward.5} parent=0 // pred_check_branch
    %229 = sbr.rel (0) target = $region21
  $region20: #{bp_model_forward.5} parent=0 // pred_region
    _
  $region21: #{bp_model_forward.5} parent=0 // pred_fallthru
    _

// kernel: bp_model_forward.6
$region0: #{bp_model_forward.6}
  #allocation0 [shape = 'u32[]', space=smem, size = 0x4, offset = 0x4, fixed_abs, tag = 'smem constant byte address 0x4 - core index']
  #allocation1 [shape = 'u32[144,128]{1,0:T(1,128)}', space=vmem, size = 0x12000, scoped, tag = 'internal scratch']
  %s0 = inlined_call_operand.vmem [shape: f32[256,3], index: 0, kind: input, shape index: {}]
  %s1 = inlined_call_operand.vmem [shape: f32[36,4], index: 1, kind: input, shape index: {}]
  %s2 = inlined_call_operand.vmem [shape: f32[48,36], index: 2, kind: input, shape index: {}]
  %s3 = inlined_call_operand.vmem [shape: f32[48,2], index: 3, kind: output, shape index: {}]
  %s4 = sld [smem:[#allocation0]]
  $region26: #{bp_model_forward.6} parent=0
    _
  %s6 = ssub.s32 1, %s4
  %s7 = scalar_select 0, %s6, %s4
  // Predicated region
  $region2: #{bp_model_forward.6} parent=0 // pred_check
    _
  $region3: #{bp_model_forward.6} parent=0 // pred_check_branch
    %9 = sbr.rel (0) target = $region5
  $region4: #{bp_model_forward.6} parent=0 // pred_region
    _
  $region5: #{bp_model_forward.6} parent=0 // pred_fallthru
    _
  // Predicated region
  $region6: #{bp_model_forward.6} parent=0 // pred_check
    _
  $region7: #{bp_model_forward.6} parent=0 // pred_check_branch
    %11 = sbr.rel (0) target = $region9
  $region8: #{bp_model_forward.6} parent=0 // pred_region
    _
  $region9: #{bp_model_forward.6} parent=0 // pred_fallthru
    _
  // Predicated region
  $region10: #{bp_model_forward.6} parent=0 // pred_check
    _
  $region11: #{bp_model_forward.6} parent=0 // pred_check_branch
    %13 = sbr.rel (0) target = $region13
  $region12: #{bp_model_forward.6} parent=0 // pred_region
    _
  $region13: #{bp_model_forward.6} parent=0 // pred_fallthru
    _
  %p14 = scmp.eq.s32.totalorder 0, 0
  // Predicated region
  $region14: #{bp_model_forward.6} parent=0 // pred_check
    %p15 = pneg %p14
  $region15: #{bp_model_forward.6} parent=0 // pred_check_branch
    %17 = sbr.rel (%p15) target = $region17
  $region16: #{bp_model_forward.6} parent=0 // pred_region
    %vm18 = vcmask 15360
    %19 = vst.msk [vmem:[%s3] sm:$0xff] %vm18, 0.0
    %20 = vst.msk [vmem:[%s3 + $0x8] sm:$0xff] %vm18, 0.0
    %21 = vst.msk [vmem:[%s3 + $0x10] sm:$0xff] %vm18, 0.0
    %22 = vst.msk [vmem:[%s3 + $0x18] sm:$0xff] %vm18, 0.0
    %23 = vst.msk [vmem:[%s3 + $0x20] sm:$0xff] %vm18, 0.0
    %24 = vst.msk [vmem:[%s3 + $0x28] sm:$0xff] %vm18, 0.0
  $region17: #{bp_model_forward.6} parent=0 // pred_fallthru
    _
  %v25 = vld [vmem:[%s0] sm:$0xff]
  %v26 = vld [vmem:[%s0 + $0x8] sm:$0xff]
  %v27 = vld [vmem:[%s0 + $0x10] sm:$0xff]
  %v28 = vld [vmem:[%s0 + $0x18] sm:$0xff]
  %v29 = vld [vmem:[%s0 + $0x20] sm:$0xff]
  %v30 = vld [vmem:[%s0 + $0x28] sm:$0xff]
  %v31 = vld [vmem:[%s0 + $0x30] sm:$0xff]
  %v32 = vld [vmem:[%s0 + $0x38] sm:$0xff]
  %v33 = vld [vmem:[%s0 + $0x40] sm:$0xff]
  %v34 = vld [vmem:[%s0 + $0x48] sm:$0xff]
  %v35 = vld [vmem:[%s0 + $0x50] sm:$0xff]
  %v36 = vld [vmem:[%s0 + $0x58] sm:$0xff]
  %v37 = vld [vmem:[%s0 + $0x60] sm:$0xff]
  %v38 = vld [vmem:[%s0 + $0x68] sm:$0xff]
  %v39 = vld [vmem:[%s0 + $0x70] sm:$0xff]
  %v40 = vld [vmem:[%s0 + $0x78] sm:$0xff]
  %v41 = vld [vmem:[%s0 + $0x80] sm:$0xff]
  %v42 = vld [vmem:[%s0 + $0x88] sm:$0xff]
  %v43 = vld [vmem:[%s0 + $0x90] sm:$0xff]
  %v44 = vld [vmem:[%s0 + $0x98] sm:$0xff]
  %v45 = vld [vmem:[%s0 + $0xa0] sm:$0xff]
  %v46 = vld [vmem:[%s0 + $0xa8] sm:$0xff]
  %v47 = vld [vmem:[%s0 + $0xb0] sm:$0xff]
  %v48 = vld [vmem:[%s0 + $0xb8] sm:$0xff]
  %v49 = vld [vmem:[%s0 + $0xc0] sm:$0xff]
  %v50 = vld [vmem:[%s0 + $0xc8] sm:$0xff]
  %v51 = vld [vmem:[%s0 + $0xd0] sm:$0xff]
  %v52 = vld [vmem:[%s0 + $0xd8] sm:$0xff]
  %v53 = vld [vmem:[%s0 + $0xe0] sm:$0xff]
  %v54 = vld [vmem:[%s0 + $0xe8] sm:$0xff]
  %v55 = vld [vmem:[%s0 + $0xf0] sm:$0xff]
  %v56 = vld [vmem:[%s0 + $0xf8] sm:$0xff]
  %v57 = vld [vmem:[%s1] sm:$0xff]
  %v58 = vld [vmem:[%s1 + $0x8] sm:$0xff]
  %v59 = vld [vmem:[%s1 + $0x10] sm:$0xff]
  %v60 = vld [vmem:[%s1 + $0x18] sm:$0xff]
  %v61 = vld [vmem:[%s1 + $0x20] sm:$0xf]
  %63 = vset.pattern.permute.xlu0 3
  %64 = vperm.xlu0 %63, %v57
  %v65 = vpop.permute.xlu0 %64
  %68 = vset.pattern.permute.xlu0 3
  %69 = vperm.xlu0 %68, %v58
  %v70 = vpop.permute.xlu0 %69
  %73 = vset.pattern.permute.xlu0 3
  %74 = vperm.xlu0 %73, %v59
  %v75 = vpop.permute.xlu0 %74
  %78 = vset.pattern.permute.xlu0 3
  %79 = vperm.xlu0 %78, %v60
  %v80 = vpop.permute.xlu0 %79
  %83 = vset.pattern.permute.xlu0 3
  %84 = vperm.xlu0 %83, %v61
  %v85 = vpop.permute.xlu0 %84
  %vm87 = vcmask 23552
  %v88 = vsel %vm87, %v57, 0
  %v90 = vsel %vm87, %v58, 0
  %v92 = vsel %vm87, %v59, 0
  %v94 = vsel %vm87, %v60, 0
  %v96 = vsel %vm87, %v61, 0
  %v99 = vsel %vm87, %v25, 0
  %v102 = vsel %vm87, %v26, 0
  %v105 = vsel %vm87, %v27, 0
  %v108 = vsel %vm87, %v28, 0
  %v111 = vsel %vm87, %v29, 0
  %v114 = vsel %vm87, %v30, 0
  %v117 = vsel %vm87, %v31, 0
  %v120 = vsel %vm87, %v32, 0
  %v123 = vsel %vm87, %v33, 0
  %v126 = vsel %vm87, %v34, 0
  %v129 = vsel %vm87, %v35, 0
  %v132 = vsel %vm87, %v36, 0
  %v135 = vsel %vm87, %v37, 0
  %v138 = vsel %vm87, %v38, 0
  %v141 = vsel %vm87, %v39, 0
  %v144 = vsel %vm87, %v40, 0
  %v147 = vsel %vm87, %v41, 0
  %v150 = vsel %vm87, %v42, 0
  %v153 = vsel %vm87, %v43, 0
  %v156 = vsel %vm87, %v44, 0
  %v159 = vsel %vm87, %v45, 0
  %v162 = vsel %vm87, %v46, 0
  %v165 = vsel %vm87, %v47, 0
  %v168 = vsel %vm87, %v48, 0
  %v171 = vsel %vm87, %v49, 0
  %v174 = vsel %vm87, %v50, 0
  %v177 = vsel %vm87, %v51, 0
  %v180 = vsel %vm87, %v52, 0
  %v183 = vsel %vm87, %v53, 0
  %v186 = vsel %vm87, %v54, 0
  %v189 = vsel %vm87, %v55, 0
  %v192 = vsel %vm87, %v56, 0
  %194 = vmatprep.subr.mxu0 0.0
  %195 = vmatpush1.xpose.msra.mxu0 %v144
  %196 = vmatprep.subr.mxu0 0.0
  %197 = vmatpush1.xpose.msra.mxu0 %v141
  %198 = vmatprep.subr.mxu0 0.0
  %199 = vmatpush1.xpose.msra.mxu0 %v138
  %200 = vmatprep.subr.mxu0 0.0
  %201 = vmatpush1.xpose.msra.mxu0 %v135
  %202 = vmatprep.subr.mxu0 0.0
  %203 = vmatpush1.xpose.msra.mxu0 %v132
  %204 = vmatprep.subr.mxu0 0.0
  %205 = vmatpush1.xpose.msra.mxu0 %v129
  %206 = vmatprep.subr.mxu0 0.0
  %207 = vmatpush1.xpose.msra.mxu0 %v126
  %208 = vmatprep.subr.mxu0 0.0
  %209 = vmatpush1.xpose.msra.mxu0 %v123
  %210 = vmatprep.subr.mxu0 0.0
  %211 = vmatpush1.xpose.msra.mxu0 %v120
  %212 = vmatprep.subr.mxu0 0.0
  %213 = vmatpush1.xpose.msra.mxu0 %v117
  %214 = vmatprep.subr.mxu0 0.0
  %215 = vmatpush1.xpose.msra.mxu0 %v114
  %216 = vmatprep.subr.mxu0 0.0
  %217 = vmatpush1.xpose.msra.mxu0 %v111
  %218 = vmatprep.subr.mxu0 0.0
  %219 = vmatpush1.xpose.msra.mxu0 %v108
  %220 = vmatprep.subr.mxu0 0.0
  %221 = vmatpush1.xpose.msra.mxu0 %v105
  %222 = vmatprep.subr.mxu0 0.0
  %223 = vmatpush1.xpose.msra.mxu0 %v102
  %224 = vmatprep.subr.mxu0 0.0
  %225 = vmatpush1.xpose.msra.mxu0 %v99
  %226 = vmatprep.subr.mxu0 0.0
  %227 = vmatpush2.xpose.msra.mxu0 %v192
  %228 = vmatprep.subr.mxu0 0.0
  %229 = vmatpush2.xpose.msra.mxu0 %v189
  %230 = vmatprep.subr.mxu0 0.0
  %231 = vmatpush2.xpose.msra.mxu0 %v186
  %232 = vmatprep.subr.mxu0 0.0
  %233 = vmatpush2.xpose.msra.mxu0 %v183
  %234 = vmatprep.subr.mxu0 0.0
  %235 = vmatpush2.xpose.msra.mxu0 %v180
  %236 = vmatprep.subr.mxu0 0.0
  %237 = vmatpush2.xpose.msra.mxu0 %v177
  %238 = vmatprep.subr.mxu0 0.0
  %239 = vmatpush2.xpose.msra.mxu0 %v174
  %240 = vmatprep.subr.mxu0 0.0
  %241 = vmatpush2.xpose.msra.mxu0 %v171
  %242 = vmatprep.subr.mxu0 0.0
  %243 = vmatpush2.xpose.msra.mxu0 %v168
  %244 = vmatprep.subr.mxu0 0.0
  %245 = vmatpush2.xpose.msra.mxu0 %v165
  %246 = vmatprep.subr.mxu0 0.0
  %247 = vmatpush2.xpose.msra.mxu0 %v162
  %248 = vmatprep.subr.mxu0 0.0
  %249 = vmatpush2.xpose.msra.mxu0 %v159
  %250 = vmatprep.subr.mxu0 0.0
  %251 = vmatpush2.xpose.msra.mxu0 %v156
  %252 = vmatprep.subr.mxu0 0.0
  %253 = vmatpush2.xpose.msra.mxu0 %v153
  %254 = vmatprep.subr.mxu0 0.0
  %255 = vmatpush2.xpose.msra.mxu0 %v150
  %256 = vmatprep.subr.mxu0 0.0
  %257 = vmatpush2.xpose.msra.mxu0 %v147
  %258 = vmatprep.mubr.f32.mxu0 0.0
  %259 = vmatmul.mubr.f32.gmra.mxu0 %v88
  %v260 = vpop.f32.mrf.mxu0
  %v261 = vadd.f32 %v65, %v260
  %v262 = vpop.f32.mrf.mxu0
  %v263 = vadd.f32 %v65, %v262
  %264 = vmatprep.mubr.f32.mxu0 0.0
  %265 = vmatmul.mubr.f32.gmra.mxu0 %v90
  %v266 = vpop.f32.mrf.mxu0
  %v267 = vadd.f32 %v70, %v266
  %v268 = vpop.f32.mrf.mxu0
  %v269 = vadd.f32 %v70, %v268
  %270 = vmatprep.mubr.f32.mxu0 0.0
  %271 = vmatmul.mubr.f32.gmra.mxu0 %v92
  %v272 = vpop.f32.mrf.mxu0
  %v273 = vadd.f32 %v75, %v272
  %v274 = vpop.f32.mrf.mxu0
  %v275 = vadd.f32 %v75, %v274
  %276 = vmatprep.mubr.f32.mxu0 0.0
  %277 = vmatmul.mubr.f32.gmra.mxu0 %v94
  %v278 = vpop.f32.mrf.mxu0
  %v279 = vadd.f32 %v80, %v278
  %v280 = vpop.f32.mrf.mxu0
  %v281 = vadd.f32 %v80, %v280
  %282 = vmatprep.mubr.f32.mxu0 0.0
  %283 = vmatmul.mubr.f32.gmra.mxu0 %v96
  %v284 = vpop.f32.mrf.mxu0
  %v285 = vadd.f32 %v85, %v284
  %v286 = vpop.f32.mrf.mxu0
  %v287 = vadd.f32 %v85, %v286
  %288 = vdwg.mxu0
  %v289 = vmax.f32 %v261, 0.0
  %v290 = vmax.f32 %v263, 0.0
  %v291 = vmax.f32 %v267, 0.0
  %v292 = vmax.f32 %v269, 0.0
  %v293 = vmax.f32 %v273, 0.0
  %v294 = vmax.f32 %v275, 0.0
  %v295 = vmax.f32 %v279, 0.0
  %v296 = vmax.f32 %v281, 0.0
  %v297 = vmax.f32 %v285, 0.0
  %v298 = vmax.f32 %v287, 0.0
  %v299 = vld [vmem:[%s2] sm:$0xff]
  %v300 = vld [vmem:[%s2 + $0x8] sm:$0xff]
  %v301 = vld [vmem:[%s2 + $0x10] sm:$0xff]
  %v302 = vld [vmem:[%s2 + $0x18] sm:$0xff]
  %v303 = vld [vmem:[%s2 + $0x20] sm:$0xff]
  %v304 = vld [vmem:[%s2 + $0x28] sm:$0xff]
  %vm305 = vcmask 293888
  %v307 = vsel %vm305, %v299, 0
  %v310 = vsel %vm305, %v300, 0
  %v313 = vsel %vm305, %v301, 0
  %v316 = vsel %vm305, %v302, 0
  %v319 = vsel %vm305, %v303, 0
  %v322 = vsel %vm305, %v304, 0
  %vm324 = vcmask 1043456
  %v326 = vsel %vm324, %v297, 0
  %v329 = vsel %vm324, %v298, 0
  %331 = vmatprep.subr.mxu0 0.0
  %332 = vmatpush1.msra.mxu0 0.0
  %333 = vmatprep.subr.mxu0 0.0
  %334 = vmatpush1.msra.mxu0 0.0
  %335 = vmatprep.subr.mxu0 0.0
  %336 = vmatpush1.msra.mxu0 0.0
  %337 = vmatprep.subr.mxu0 0.0
  %338 = vmatpush1.msra.mxu0 0.0
  %339 = vmatprep.subr.mxu0 0.0
  %340 = vmatpush1.msra.mxu0 0.0
  %341 = vmatprep.subr.mxu0 0.0
  %342 = vmatpush1.msra.mxu0 0.0
  %343 = vmatprep.subr.mxu0 0.0
  %344 = vmatpush1.msra.mxu0 0.0
  %345 = vmatprep.subr.mxu0 0.0
  %346 = vmatpush1.msra.mxu0 0.0
  %347 = vmatprep.subr.mxu0 0.0
  %348 = vmatpush1.msra.mxu0 0.0
  %349 = vmatprep.subr.mxu0 0.0
  %350 = vmatpush1.msra.mxu0 0.0
  %351 = vmatprep.subr.mxu0 0.0
  %352 = vmatpush1.msra.mxu0 0.0
  %353 = vmatprep.subr.mxu0 %v329
  %354 = vmatpush1.msra.mxu0 %v326
  %355 = vmatprep.subr.mxu0 %v296
  %356 = vmatpush1.msra.mxu0 %v295
  %357 = vmatprep.subr.mxu0 %v294
  %358 = vmatpush1.msra.mxu0 %v293
  %359 = vmatprep.subr.mxu0 %v292
  %360 = vmatpush1.msra.mxu0 %v291
  %361 = vmatprep.subr.mxu0 %v290
  %362 = vmatpush1.msra.mxu0 %v289
  %363 = vmatprep.subr.mxu0 0.0
  %364 = vmatpush2.msra.mxu0 0.0
  %365 = vmatprep.subr.mxu0 0.0
  %366 = vmatpush2.msra.mxu0 0.0
  %367 = vmatprep.subr.mxu0 0.0
  %368 = vmatpush2.msra.mxu0 0.0
  %369 = vmatprep.subr.mxu0 0.0
  %370 = vmatpush2.msra.mxu0 0.0
  %371 = vmatprep.subr.mxu0 0.0
  %372 = vmatpush2.msra.mxu0 0.0
  %373 = vmatprep.subr.mxu0 0.0
  %374 = vmatpush2.msra.mxu0 0.0
  %375 = vmatprep.subr.mxu0 0.0
  %376 = vmatpush2.msra.mxu0 0.0
  %377 = vmatprep.subr.mxu0 0.0
  %378 = vmatpush2.msra.mxu0 0.0
  %379 = vmatprep.subr.mxu0 0.0
  %380 = vmatpush2.msra.mxu0 0.0
  %381 = vmatprep.subr.mxu0 0.0
  %382 = vmatpush2.msra.mxu0 0.0
  %383 = vmatprep.subr.mxu0 0.0
  %384 = vmatpush2.msra.mxu0 0.0
  %385 = vmatprep.subr.mxu0 0.0
  %386 = vmatpush2.msra.mxu0 0.0
  %387 = vmatprep.subr.mxu0 0.0
  %388 = vmatpush2.msra.mxu0 0.0
  %389 = vmatprep.subr.mxu0 0.0
  %390 = vmatpush2.msra.mxu0 0.0
  %391 = vmatprep.subr.mxu0 0.0
  %392 = vmatpush2.msra.mxu0 0.0
  %393 = vmatprep.subr.mxu0 0.0
  %394 = vmatpush2.msra.mxu0 0.0
  %395 = vmatprep.mubr.f32.mxu0 0.0
  %396 = vmatmul.mubr.f32.gmra.mxu0 %v307
  %v397 = vpop.f32.mrf.mxu0
  %v398 = vadd.f32 0.0, %v397
  %v399 = vpop.f32.mrf.mxu0
  %v400 = vadd.f32 0.0, %v399
  %401 = vmatprep.mubr.f32.mxu0 0.0
  %402 = vmatmul.mubr.f32.gmra.mxu0 %v310
  %v403 = vpop.f32.mrf.mxu0
  %v404 = vadd.f32 0.0, %v403
  %v405 = vpop.f32.mrf.mxu0
  %v406 = vadd.f32 0.0, %v405
  %407 = vmatprep.mubr.f32.mxu0 0.0
  %408 = vmatmul.mubr.f32.gmra.mxu0 %v313
  %v409 = vpop.f32.mrf.mxu0
  %v410 = vadd.f32 0.0, %v409
  %v411 = vpop.f32.mrf.mxu0
  %v412 = vadd.f32 0.0, %v411
  %413 = vmatprep.mubr.f32.mxu0 0.0
  %414 = vmatmul.mubr.f32.gmra.mxu0 %v316
  %v415 = vpop.f32.mrf.mxu0
  %v416 = vadd.f32 0.0, %v415
  %v417 = vpop.f32.mrf.mxu0
  %v418 = vadd.f32 0.0, %v417
  %419 = vmatprep.mubr.f32.mxu0 0.0
  %420 = vmatmul.mubr.f32.gmra.mxu0 %v319
  %v421 = vpop.f32.mrf.mxu0
  %v422 = vadd.f32 0.0, %v421
  %v423 = vpop.f32.mrf.mxu0
  %v424 = vadd.f32 0.0, %v423
  %425 = vmatprep.mubr.f32.mxu0 0.0
  %426 = vmatmul.mubr.f32.gmra.mxu0 %v322
  %v427 = vpop.f32.mrf.mxu0
  %v428 = vadd.f32 0.0, %v427
  %v429 = vpop.f32.mrf.mxu0
  %v430 = vadd.f32 0.0, %v429
  %431 = vdwg.mxu0
  %v432 = vadd.f32 %v398, %v400
  %433 = vadd.xlane.f32.xlu0 %v432
  %v434 = vpop.xlane.xlu0 %433
  %v435 = vadd.f32 %v404, %v406
  %436 = vadd.xlane.f32.xlu0 %v435
  %v437 = vpop.xlane.xlu0 %436
  %v438 = vadd.f32 %v410, %v412
  %439 = vadd.xlane.f32.xlu0 %v438
  %v440 = vpop.xlane.xlu0 %439
  %v441 = vadd.f32 %v416, %v418
  %442 = vadd.xlane.f32.xlu0 %v441
  %v443 = vpop.xlane.xlu0 %442
  %v444 = vadd.f32 %v422, %v424
  %445 = vadd.xlane.f32.xlu0 %v444
  %v446 = vpop.xlane.xlu0 %445
  %v447 = vadd.f32 %v428, %v430
  %448 = vadd.xlane.f32.xlu0 %v447
  %v449 = vpop.xlane.xlu0 %448
  %v450 = vmul.f32 %v398, %v398
  %v451 = vmul.f32 %v400, %v400
  %v452 = vmul.f32 %v404, %v404
  %v453 = vmul.f32 %v406, %v406
  %v454 = vmul.f32 %v410, %v410
  %v455 = vmul.f32 %v412, %v412
  %v456 = vmul.f32 %v416, %v416
  %v457 = vmul.f32 %v418, %v418
  %v458 = vmul.f32 %v422, %v422
  %v459 = vmul.f32 %v424, %v424
  %v460 = vmul.f32 %v428, %v428
  %v461 = vmul.f32 %v430, %v430
  %v462 = vadd.f32 %v450, %v451
  %463 = vadd.xlane.f32.xlu0 %v462
  %v464 = vpop.xlane.xlu0 %463
  %v465 = vadd.f32 %v452, %v453
  %466 = vadd.xlane.f32.xlu0 %v465
  %v467 = vpop.xlane.xlu0 %466
  %v468 = vadd.f32 %v454, %v455
  %469 = vadd.xlane.f32.xlu0 %v468
  %v470 = vpop.xlane.xlu0 %469
  %v471 = vadd.f32 %v456, %v457
  %472 = vadd.xlane.f32.xlu0 %v471
  %v473 = vpop.xlane.xlu0 %472
  %v474 = vadd.f32 %v458, %v459
  %475 = vadd.xlane.f32.xlu0 %v474
  %v476 = vpop.xlane.xlu0 %475
  %v477 = vadd.f32 %v460, %v461
  %478 = vadd.xlane.f32.xlu0 %v477
  %v479 = vpop.xlane.xlu0 %478
  %v480 = vld [vmem:[%s3] sm:$0xff]
  %v481 = vld [vmem:[%s3 + $0x8] sm:$0xff]
  %v482 = vld [vmem:[%s3 + $0x10] sm:$0xff]
  %v483 = vld [vmem:[%s3 + $0x18] sm:$0xff]
  %v484 = vld [vmem:[%s3 + $0x20] sm:$0xff]
  %v485 = vld [vmem:[%s3 + $0x28] sm:$0xff]
  %vm486 = vcmask 7168
  %v487 = vsel %vm486, %v434, %v464
  %v488 = vsel %vm486, %v437, %v467
  %v489 = vsel %vm486, %v440, %v470
  %v490 = vsel %vm486, %v443, %v473
  %v491 = vsel %vm486, %v446, %v476
  %v492 = vsel %vm486, %v449, %v479
  %v493 = vadd.f32 %v480, %v487
  %v494 = vadd.f32 %v481, %v488
  %v495 = vadd.f32 %v482, %v489
  %v496 = vadd.f32 %v483, %v490
  %v497 = vadd.f32 %v484, %v491
  %v498 = vadd.f32 %v485, %v492
  %vm499 = vcmask 15360
  %500 = vst.msk [vmem:[%s3] sm:$0xff] %vm499, %v493
  %501 = vst.msk [vmem:[%s3 + $0x8] sm:$0xff] %vm499, %v494
  %502 = vst.msk [vmem:[%s3 + $0x10] sm:$0xff] %vm499, %v495
  %503 = vst.msk [vmem:[%s3 + $0x18] sm:$0xff] %vm499, %v496
  %504 = vst.msk [vmem:[%s3 + $0x20] sm:$0xff] %vm499, %v497
  %505 = vst.msk [vmem:[%s3 + $0x28] sm:$0xff] %vm499, %v498
  // Predicated region
  $region18: #{bp_model_forward.6} parent=0 // pred_check
    _
  $region19: #{bp_model_forward.6} parent=0 // pred_check_branch
    %507 = sbr.rel (0) target = $region21
  $region20: #{bp_model_forward.6} parent=0 // pred_region
    _
  $region21: #{bp_model_forward.6} parent=0 // pred_fallthru
    _
  // Predicated region
  $region22: #{bp_model_forward.6} parent=0 // pred_check
    _
  $region23: #{bp_model_forward.6} parent=0 // pred_check_branch
    %509 = sbr.rel (0) target = $region25
  $region24: #{bp_model_forward.6} parent=0 // pred_region
    _
  $region25: #{bp_model_forward.6} parent=0 // pred_fallthru
    _

// kernel: bp_model_forward.7
$region0: #{bp_model_forward.7}
  #allocation0 [shape = 'u32[]', space=smem, size = 0x4, offset = 0x4, fixed_abs, tag = 'smem constant byte address 0x4 - core index']
  #allocation1 [shape = 'u32[144,128]{1,0:T(1,128)}', space=vmem, size = 0x12000, scoped, tag = 'internal scratch']
  %s0 = inlined_call_operand.vmem [shape: f32[256,3], index: 0, kind: input, shape index: {}]
  %s1 = inlined_call_operand.vmem [shape: f32[36,4], index: 1, kind: input, shape index: {}]
  %s2 = inlined_call_operand.vmem [shape: f32[48,37], index: 2, kind: input, shape index: {}]
  %s3 = inlined_call_operand.vmem [shape: f32[24,49], index: 3, kind: input, shape index: {}]
  %s4 = inlined_call_operand.vmem [shape: f32[256,24], index: 4, kind: output, shape index: {}]
  %s5 = sld [smem:[#allocation0]]
  $region26: #{bp_model_forward.7} parent=0
    _
  %s7 = ssub.s32 1, %s5
  %s8 = scalar_select 0, %s7, %s5
  // Predicated region
  $region2: #{bp_model_forward.7} parent=0 // pred_check
    _
  $region3: #{bp_model_forward.7} parent=0 // pred_check_branch
    %10 = sbr.rel (0) target = $region5
  $region4: #{bp_model_forward.7} parent=0 // pred_region
    _
  $region5: #{bp_model_forward.7} parent=0 // pred_fallthru
    _
  // Predicated region
  $region6: #{bp_model_forward.7} parent=0 // pred_check
    _
  $region7: #{bp_model_forward.7} parent=0 // pred_check_branch
    %12 = sbr.rel (0) target = $region9
  $region8: #{bp_model_forward.7} parent=0 // pred_region
    _
  $region9: #{bp_model_forward.7} parent=0 // pred_fallthru
    _
  // Predicated region
  $region10: #{bp_model_forward.7} parent=0 // pred_check
    _
  $region11: #{bp_model_forward.7} parent=0 // pred_check_branch
    %14 = sbr.rel (0) target = $region13
  $region12: #{bp_model_forward.7} parent=0 // pred_region
    _
  $region13: #{bp_model_forward.7} parent=0 // pred_fallthru
    _
  // Predicated region
  $region14: #{bp_model_forward.7} parent=0 // pred_check
    _
  $region15: #{bp_model_forward.7} parent=0 // pred_check_branch
    %16 = sbr.rel (0) target = $region17
  $region16: #{bp_model_forward.7} parent=0 // pred_region
    _
  $region17: #{bp_model_forward.7} parent=0 // pred_fallthru
    _
  %v17 = vld [vmem:[%s0] sm:$0xff]
  %v18 = vld [vmem:[%s0 + $0x8] sm:$0xff]
  %v19 = vld [vmem:[%s0 + $0x10] sm:$0xff]
  %v20 = vld [vmem:[%s0 + $0x18] sm:$0xff]
  %v21 = vld [vmem:[%s0 + $0x20] sm:$0xff]
  %v22 = vld [vmem:[%s0 + $0x28] sm:$0xff]
  %v23 = vld [vmem:[%s0 + $0x30] sm:$0xff]
  %v24 = vld [vmem:[%s0 + $0x38] sm:$0xff]
  %v25 = vld [vmem:[%s0 + $0x40] sm:$0xff]
  %v26 = vld [vmem:[%s0 + $0x48] sm:$0xff]
  %v27 = vld [vmem:[%s0 + $0x50] sm:$0xff]
  %v28 = vld [vmem:[%s0 + $0x58] sm:$0xff]
  %v29 = vld [vmem:[%s0 + $0x60] sm:$0xff]
  %v30 = vld [vmem:[%s0 + $0x68] sm:$0xff]
  %v31 = vld [vmem:[%s0 + $0x70] sm:$0xff]
  %v32 = vld [vmem:[%s0 + $0x78] sm:$0xff]
  %v33 = vld [vmem:[%s0 + $0x80] sm:$0xff]
  %v34 = vld [vmem:[%s0 + $0x88] sm:$0xff]
  %v35 = vld [vmem:[%s0 + $0x90] sm:$0xff]
  %v36 = vld [vmem:[%s0 + $0x98] sm:$0xff]
  %v37 = vld [vmem:[%s0 + $0xa0] sm:$0xff]
  %v38 = vld [vmem:[%s0 + $0xa8] sm:$0xff]
  %v39 = vld [vmem:[%s0 + $0xb0] sm:$0xff]
  %v40 = vld [vmem:[%s0 + $0xb8] sm:$0xff]
  %v41 = vld [vmem:[%s0 + $0xc0] sm:$0xff]
  %v42 = vld [vmem:[%s0 + $0xc8] sm:$0xff]
  %v43 = vld [vmem:[%s0 + $0xd0] sm:$0xff]
  %v44 = vld [vmem:[%s0 + $0xd8] sm:$0xff]
  %v45 = vld [vmem:[%s0 + $0xe0] sm:$0xff]
  %v46 = vld [vmem:[%s0 + $0xe8] sm:$0xff]
  %v47 = vld [vmem:[%s0 + $0xf0] sm:$0xff]
  %v48 = vld [vmem:[%s0 + $0xf8] sm:$0xff]
  %v49 = vld [vmem:[%s1] sm:$0xff]
  %v50 = vld [vmem:[%s1 + $0x8] sm:$0xff]
  %v51 = vld [vmem:[%s1 + $0x10] sm:$0xff]
  %v52 = vld [vmem:[%s1 + $0x18] sm:$0xff]
  %v53 = vld [vmem:[%s1 + $0x20] sm:$0xf]
  %55 = vset.pattern.permute.xlu0 3
  %56 = vperm.xlu0 %55, %v49
  %v57 = vpop.permute.xlu0 %56
  %60 = vset.pattern.permute.xlu0 3
  %61 = vperm.xlu0 %60, %v50
  %v62 = vpop.permute.xlu0 %61
  %65 = vset.pattern.permute.xlu0 3
  %66 = vperm.xlu0 %65, %v51
  %v67 = vpop.permute.xlu0 %66
  %70 = vset.pattern.permute.xlu0 3
  %71 = vperm.xlu0 %70, %v52
  %v72 = vpop.permute.xlu0 %71
  %75 = vset.pattern.permute.xlu0 3
  %76 = vperm.xlu0 %75, %v53
  %v77 = vpop.permute.xlu0 %76
  %vm79 = vcmask 23552
  %v80 = vsel %vm79, %v49, 0
  %v82 = vsel %vm79, %v50, 0
  %v84 = vsel %vm79, %v51, 0
  %v86 = vsel %vm79, %v52, 0
  %v88 = vsel %vm79, %v53, 0
  %v91 = vsel %vm79, %v17, 0
  %v94 = vsel %vm79, %v18, 0
  %v97 = vsel %vm79, %v19, 0
  %v100 = vsel %vm79, %v20, 0
  %v103 = vsel %vm79, %v21, 0
  %v106 = vsel %vm79, %v22, 0
  %v109 = vsel %vm79, %v23, 0
  %v112 = vsel %vm79, %v24, 0
  %v115 = vsel %vm79, %v25, 0
  %v118 = vsel %vm79, %v26, 0
  %v121 = vsel %vm79, %v27, 0
  %v124 = vsel %vm79, %v28, 0
  %v127 = vsel %vm79, %v29, 0
  %v130 = vsel %vm79, %v30, 0
  %v133 = vsel %vm79, %v31, 0
  %v136 = vsel %vm79, %v32, 0
  %v139 = vsel %vm79, %v33, 0
  %v142 = vsel %vm79, %v34, 0
  %v145 = vsel %vm79, %v35, 0
  %v148 = vsel %vm79, %v36, 0
  %v151 = vsel %vm79, %v37, 0
  %v154 = vsel %vm79, %v38, 0
  %v157 = vsel %vm79, %v39, 0
  %v160 = vsel %vm79, %v40, 0
  %v163 = vsel %vm79, %v41, 0
  %v166 = vsel %vm79, %v42, 0
  %v169 = vsel %vm79, %v43, 0
  %v172 = vsel %vm79, %v44, 0
  %v175 = vsel %vm79, %v45, 0
  %v178 = vsel %vm79, %v46, 0
  %v181 = vsel %vm79, %v47, 0
  %v184 = vsel %vm79, %v48, 0
  %186 = vmatprep.subr.mxu0 0.0
  %187 = vmatpush1.xpose.msra.mxu0 %v136
  %188 = vmatprep.subr.mxu0 0.0
  %189 = vmatpush1.xpose.msra.mxu0 %v133
  %190 = vmatprep.subr.mxu0 0.0
  %191 = vmatpush1.xpose.msra.mxu0 %v130
  %192 = vmatprep.subr.mxu0 0.0
  %193 = vmatpush1.xpose.msra.mxu0 %v127
  %194 = vmatprep.subr.mxu0 0.0
  %195 = vmatpush1.xpose.msra.mxu0 %v124
  %196 = vmatprep.subr.mxu0 0.0
  %197 = vmatpush1.xpose.msra.mxu0 %v121
  %198 = vmatprep.subr.mxu0 0.0
  %199 = vmatpush1.xpose.msra.mxu0 %v118
  %200 = vmatprep.subr.mxu0 0.0
  %201 = vmatpush1.xpose.msra.mxu0 %v115
  %202 = vmatprep.subr.mxu0 0.0
  %203 = vmatpush1.xpose.msra.mxu0 %v112
  %204 = vmatprep.subr.mxu0 0.0
  %205 = vmatpush1.xpose.msra.mxu0 %v109
  %206 = vmatprep.subr.mxu0 0.0
  %207 = vmatpush1.xpose.msra.mxu0 %v106
  %208 = vmatprep.subr.mxu0 0.0
  %209 = vmatpush1.xpose.msra.mxu0 %v103
  %210 = vmatprep.subr.mxu0 0.0
  %211 = vmatpush1.xpose.msra.mxu0 %v100
  %212 = vmatprep.subr.mxu0 0.0
  %213 = vmatpush1.xpose.msra.mxu0 %v97
  %214 = vmatprep.subr.mxu0 0.0
  %215 = vmatpush1.xpose.msra.mxu0 %v94
  %216 = vmatprep.subr.mxu0 0.0
  %217 = vmatpush1.xpose.msra.mxu0 %v91
  %218 = vmatprep.subr.mxu0 0.0
  %219 = vmatpush2.xpose.msra.mxu0 %v184
  %220 = vmatprep.subr.mxu0 0.0
  %221 = vmatpush2.xpose.msra.mxu0 %v181
  %222 = vmatprep.subr.mxu0 0.0
  %223 = vmatpush2.xpose.msra.mxu0 %v178
  %224 = vmatprep.subr.mxu0 0.0
  %225 = vmatpush2.xpose.msra.mxu0 %v175
  %226 = vmatprep.subr.mxu0 0.0
  %227 = vmatpush2.xpose.msra.mxu0 %v172
  %228 = vmatprep.subr.mxu0 0.0
  %229 = vmatpush2.xpose.msra.mxu0 %v169
  %230 = vmatprep.subr.mxu0 0.0
  %231 = vmatpush2.xpose.msra.mxu0 %v166
  %232 = vmatprep.subr.mxu0 0.0
  %233 = vmatpush2.xpose.msra.mxu0 %v163
  %234 = vmatprep.subr.mxu0 0.0
  %235 = vmatpush2.xpose.msra.mxu0 %v160
  %236 = vmatprep.subr.mxu0 0.0
  %237 = vmatpush2.xpose.msra.mxu0 %v157
  %238 = vmatprep.subr.mxu0 0.0
  %239 = vmatpush2.xpose.msra.mxu0 %v154
  %240 = vmatprep.subr.mxu0 0.0
  %241 = vmatpush2.xpose.msra.mxu0 %v151
  %242 = vmatprep.subr.mxu0 0.0
  %243 = vmatpush2.xpose.msra.mxu0 %v148
  %244 = vmatprep.subr.mxu0 0.0
  %245 = vmatpush2.xpose.msra.mxu0 %v145
  %246 = vmatprep.subr.mxu0 0.0
  %247 = vmatpush2.xpose.msra.mxu0 %v142
  %248 = vmatprep.subr.mxu0 0.0
  %249 = vmatpush2.xpose.msra.mxu0 %v139
  %250 = vmatprep.mubr.f32.mxu0 0.0
  %251 = vmatmul.mubr.f32.gmra.mxu0 %v80
  %v252 = vpop.f32.mrf.mxu0
  %v253 = vadd.f32 %v57, %v252
  %v254 = vpop.f32.mrf.mxu0
  %v255 = vadd.f32 %v57, %v254
  %256 = vmatprep.mubr.f32.mxu0 0.0
  %257 = vmatmul.mubr.f32.gmra.mxu0 %v82
  %v258 = vpop.f32.mrf.mxu0
  %v259 = vadd.f32 %v62, %v258
  %v260 = vpop.f32.mrf.mxu0
  %v261 = vadd.f32 %v62, %v260
  %262 = vmatprep.mubr.f32.mxu0 0.0
  %263 = vmatmul.mubr.f32.gmra.mxu0 %v84
  %v264 = vpop.f32.mrf.mxu0
  %v265 = vadd.f32 %v67, %v264
  %v266 = vpop.f32.mrf.mxu0
  %v267 = vadd.f32 %v67, %v266
  %268 = vmatprep.mubr.f32.mxu0 0.0
  %269 = vmatmul.mubr.f32.gmra.mxu0 %v86
  %v270 = vpop.f32.mrf.mxu0
  %v271 = vadd.f32 %v72, %v270
  %v272 = vpop.f32.mrf.mxu0
  %v273 = vadd.f32 %v72, %v272
  %274 = vmatprep.mubr.f32.mxu0 0.0
  %275 = vmatmul.mubr.f32.gmra.mxu0 %v88
  %v276 = vpop.f32.mrf.mxu0
  %v277 = vadd.f32 %v77, %v276
  %v278 = vpop.f32.mrf.mxu0
  %v279 = vadd.f32 %v77, %v278
  %280 = vdwg.mxu0
  %v281 = vmax.f32 %v253, 0.0
  %v282 = vmax.f32 %v255, 0.0
  %v283 = vmax.f32 %v259, 0.0
  %v284 = vmax.f32 %v261, 0.0
  %v285 = vmax.f32 %v265, 0.0
  %v286 = vmax.f32 %v267, 0.0
  %v287 = vmax.f32 %v271, 0.0
  %v288 = vmax.f32 %v273, 0.0
  %v289 = vmax.f32 %v277, 0.0
  %v290 = vmax.f32 %v279, 0.0
  %v291 = vld [vmem:[%s2] sm:$0xff]
  %v292 = vld [vmem:[%s2 + $0x8] sm:$0xff]
  %v293 = vld [vmem:[%s2 + $0x10] sm:$0xff]
  %v294 = vld [vmem:[%s2 + $0x18] sm:$0xff]
  %v295 = vld [vmem:[%s2 + $0x20] sm:$0xff]
  %v296 = vld [vmem:[%s2 + $0x28] sm:$0xff]
  %298 = vset.pattern.permute.xlu0 36
  %299 = vperm.xlu0 %298, %v291
  %v300 = vpop.permute.xlu0 %299
  %303 = vset.pattern.permute.xlu0 36
  %304 = vperm.xlu0 %303, %v292
  %v305 = vpop.permute.xlu0 %304
  %308 = vset.pattern.permute.xlu0 36
  %309 = vperm.xlu0 %308, %v293
  %v310 = vpop.permute.xlu0 %309
  %313 = vset.pattern.permute.xlu0 36
  %314 = vperm.xlu0 %313, %v294
  %v315 = vpop.permute.xlu0 %314
  %318 = vset.pattern.permute.xlu0 36
  %319 = vperm.xlu0 %318, %v295
  %v320 = vpop.permute.xlu0 %319
  %323 = vset.pattern.permute.xlu0 36
  %324 = vperm.xlu0 %323, %v296
  %v325 = vpop.permute.xlu0 %324
  %vm327 = vcmask 293888
  %v328 = vsel %vm327, %v291, 0
  %v330 = vsel %vm327, %v292, 0
  %v332 = vsel %vm327, %v293, 0
  %v334 = vsel %vm327, %v294, 0
  %v336 = vsel %vm327, %v295, 0
  %v338 = vsel %vm327, %v296, 0
  %vm340 = vcmask 1043456
  %v342 = vsel %vm340, %v289, 0
  %v345 = vsel %vm340, %v290, 0
  %347 = vmatprep.subr.mxu0 0.0
  %348 = vmatpush1.msra.mxu0 0.0
  %349 = vmatprep.subr.mxu0 0.0
  %350 = vmatpush1.msra.mxu0 0.0
  %351 = vmatprep.subr.mxu0 0.0
  %352 = vmatpush1.msra.mxu0 0.0
  %353 = vmatprep.subr.mxu0 0.0
  %354 = vmatpush1.msra.mxu0 0.0
  %355 = vmatprep.subr.mxu0 0.0
  %356 = vmatpush1.msra.mxu0 0.0
  %357 = vmatprep.subr.mxu0 0.0
  %358 = vmatpush1.msra.mxu0 0.0
  %359 = vmatprep.subr.mxu0 0.0
  %360 = vmatpush1.msra.mxu0 0.0
  %361 = vmatprep.subr.mxu0 0.0
  %362 = vmatpush1.msra.mxu0 0.0
  %363 = vmatprep.subr.mxu0 0.0
  %364 = vmatpush1.msra.mxu0 0.0
  %365 = vmatprep.subr.mxu0 0.0
  %366 = vmatpush1.msra.mxu0 0.0
  %367 = vmatprep.subr.mxu0 0.0
  %368 = vmatpush1.msra.mxu0 0.0
  %369 = vmatprep.subr.mxu0 %v345
  %370 = vmatpush1.msra.mxu0 %v342
  %371 = vmatprep.subr.mxu0 %v288
  %372 = vmatpush1.msra.mxu0 %v287
  %373 = vmatprep.subr.mxu0 %v286
  %374 = vmatpush1.msra.mxu0 %v285
  %375 = vmatprep.subr.mxu0 %v284
  %376 = vmatpush1.msra.mxu0 %v283
  %377 = vmatprep.subr.mxu0 %v282
  %378 = vmatpush1.msra.mxu0 %v281
  %379 = vmatprep.subr.mxu0 0.0
  %380 = vmatpush2.msra.mxu0 0.0
  %381 = vmatprep.subr.mxu0 0.0
  %382 = vmatpush2.msra.mxu0 0.0
  %383 = vmatprep.subr.mxu0 0.0
  %384 = vmatpush2.msra.mxu0 0.0
  %385 = vmatprep.subr.mxu0 0.0
  %386 = vmatpush2.msra.mxu0 0.0
  %387 = vmatprep.subr.mxu0 0.0
  %388 = vmatpush2.msra.mxu0 0.0
  %389 = vmatprep.subr.mxu0 0.0
  %390 = vmatpush2.msra.mxu0 0.0
  %391 = vmatprep.subr.mxu0 0.0
  %392 = vmatpush2.msra.mxu0 0.0
  %393 = vmatprep.subr.mxu0 0.0
  %394 = vmatpush2.msra.mxu0 0.0
  %395 = vmatprep.subr.mxu0 0.0
  %396 = vmatpush2.msra.mxu0 0.0
  %397 = vmatprep.subr.mxu0 0.0
  %398 = vmatpush2.msra.mxu0 0.0
  %399 = vmatprep.subr.mxu0 0.0
  %400 = vmatpush2.msra.mxu0 0.0
  %401 = vmatprep.subr.mxu0 0.0
  %402 = vmatpush2.msra.mxu0 0.0
  %403 = vmatprep.subr.mxu0 0.0
  %404 = vmatpush2.msra.mxu0 0.0
  %405 = vmatprep.subr.mxu0 0.0
  %406 = vmatpush2.msra.mxu0 0.0
  %407 = vmatprep.subr.mxu0 0.0
  %408 = vmatpush2.msra.mxu0 0.0
  %409 = vmatprep.subr.mxu0 0.0
  %410 = vmatpush2.msra.mxu0 0.0
  %411 = vmatprep.mubr.f32.mxu0 0.0
  %412 = vmatmul.mubr.f32.gmra.mxu0 %v328
  %v413 = vpop.f32.mrf.mxu0
  %v414 = vadd.f32 %v300, %v413
  %v415 = vpop.f32.mrf.mxu0
  %v416 = vadd.f32 %v300, %v415
  %417 = vmatprep.mubr.f32.mxu0 0.0
  %418 = vmatmul.mubr.f32.gmra.mxu0 %v330
  %v419 = vpop.f32.mrf.mxu0
  %v420 = vadd.f32 %v305, %v419
  %v421 = vpop.f32.mrf.mxu0
  %v422 = vadd.f32 %v305, %v421
  %423 = vmatprep.mubr.f32.mxu0 0.0
  %424 = vmatmul.mubr.f32.gmra.mxu0 %v332
  %v425 = vpop.f32.mrf.mxu0
  %v426 = vadd.f32 %v310, %v425
  %v427 = vpop.f32.mrf.mxu0
  %v428 = vadd.f32 %v310, %v427
  %429 = vmatprep.mubr.f32.mxu0 0.0
  %430 = vmatmul.mubr.f32.gmra.mxu0 %v334
  %v431 = vpop.f32.mrf.mxu0
  %v432 = vadd.f32 %v315, %v431
  %v433 = vpop.f32.mrf.mxu0
  %v434 = vadd.f32 %v315, %v433
  %435 = vmatprep.mubr.f32.mxu0 0.0
  %436 = vmatmul.mubr.f32.gmra.mxu0 %v336
  %v437 = vpop.f32.mrf.mxu0
  %v438 = vadd.f32 %v320, %v437
  %v439 = vpop.f32.mrf.mxu0
  %v440 = vadd.f32 %v320, %v439
  %441 = vmatprep.mubr.f32.mxu0 0.0
  %442 = vmatmul.mubr.f32.gmra.mxu0 %v338
  %v443 = vpop.f32.mrf.mxu0
  %v444 = vadd.f32 %v325, %v443
  %v445 = vpop.f32.mrf.mxu0
  %v446 = vadd.f32 %v325, %v445
  %447 = vdwg.mxu0
  %v448 = vmax.f32 %v414, 0.0
  %v449 = vmax.f32 %v416, 0.0
  %v450 = vmax.f32 %v420, 0.0
  %v451 = vmax.f32 %v422, 0.0
  %v452 = vmax.f32 %v426, 0.0
  %v453 = vmax.f32 %v428, 0.0
  %v454 = vmax.f32 %v432, 0.0
  %v455 = vmax.f32 %v434, 0.0
  %v456 = vmax.f32 %v438, 0.0
  %v457 = vmax.f32 %v440, 0.0
  %v458 = vmax.f32 %v444, 0.0
  %v459 = vmax.f32 %v446, 0.0
  %v460 = vld [vmem:[%s3] sm:$0xff]
  %v461 = vld [vmem:[%s3 + $0x8] sm:$0xff]
  %v462 = vld [vmem:[%s3 + $0x10] sm:$0xff]
  %464 = vset.pattern.permute.xlu0 48
  %465 = vperm.xlu0 %464, %v460
  %v466 = vpop.permute.xlu0 %465
  %469 = vset.pattern.permute.xlu0 48
  %470 = vperm.xlu0 %469, %v461
  %v471 = vpop.permute.xlu0 %470
  %474 = vset.pattern.permute.xlu0 48
  %475 = vperm.xlu0 %474, %v462
  %v476 = vpop.permute.xlu0 %475
  %vm478 = vcmask 392192
  %v479 = vsel %vm478, %v460, 0
  %v481 = vsel %vm478, %v461, 0
  %v483 = vsel %vm478, %v462, 0
  %485 = vmatprep.subr.mxu0 0.0
  %486 = vmatpush1.msra.mxu0 0.0
  %487 = vmatprep.subr.mxu0 0.0
  %488 = vmatpush1.msra.mxu0 0.0
  %489 = vmatprep.subr.mxu0 0.0
  %490 = vmatpush1.msra.mxu0 0.0
  %491 = vmatprep.subr.mxu0 0.0
  %492 = vmatpush1.msra.mxu0 0.0
  %493 = vmatprep.subr.mxu0 0.0
  %494 = vmatpush1.msra.mxu0 0.0
  %495 = vmatprep.subr.mxu0 0.0
  %496 = vmatpush1.msra.mxu0 0.0
  %497 = vmatprep.subr.mxu0 0.0
  %498 = vmatpush1.msra.mxu0 0.0
  %499 = vmatprep.subr.mxu0 0.0
  %500 = vmatpush1.msra.mxu0 0.0
  %501 = vmatprep.subr.mxu0 0.0
  %502 = vmatpush1.msra.mxu0 0.0
  %503 = vmatprep.subr.mxu0 0.0
  %504 = vmatpush1.msra.mxu0 0.0
  %505 = vmatprep.subr.mxu0 %v459
  %506 = vmatpush1.msra.mxu0 %v458
  %507 = vmatprep.subr.mxu0 %v457
  %508 = vmatpush1.msra.mxu0 %v456
  %509 = vmatprep.subr.mxu0 %v455
  %510 = vmatpush1.msra.mxu0 %v454
  %511 = vmatprep.subr.mxu0 %v453
  %512 = vmatpush1.msra.mxu0 %v452
  %513 = vmatprep.subr.mxu0 %v451
  %514 = vmatpush1.msra.mxu0 %v450
  %515 = vmatprep.subr.mxu0 %v449
  %516 = vmatpush1.msra.mxu0 %v448
  %517 = vmatprep.subr.mxu0 0.0
  %518 = vmatpush2.msra.mxu0 0.0
  %519 = vmatprep.subr.mxu0 0.0
  %520 = vmatpush2.msra.mxu0 0.0
  %521 = vmatprep.subr.mxu0 0.0
  %522 = vmatpush2.msra.mxu0 0.0
  %523 = vmatprep.subr.mxu0 0.0
  %524 = vmatpush2.msra.mxu0 0.0
  %525 = vmatprep.subr.mxu0 0.0
  %526 = vmatpush2.msra.mxu0 0.0
  %527 = vmatprep.subr.mxu0 0.0
  %528 = vmatpush2.msra.mxu0 0.0
  %529 = vmatprep.subr.mxu0 0.0
  %530 = vmatpush2.msra.mxu0 0.0
  %531 = vmatprep.subr.mxu0 0.0
  %532 = vmatpush2.msra.mxu0 0.0
  %533 = vmatprep.subr.mxu0 0.0
  %534 = vmatpush2.msra.mxu0 0.0
  %535 = vmatprep.subr.mxu0 0.0
  %536 = vmatpush2.msra.mxu0 0.0
  %537 = vmatprep.subr.mxu0 0.0
  %538 = vmatpush2.msra.mxu0 0.0
  %539 = vmatprep.subr.mxu0 0.0
  %540 = vmatpush2.msra.mxu0 0.0
  %541 = vmatprep.subr.mxu0 0.0
  %542 = vmatpush2.msra.mxu0 0.0
  %543 = vmatprep.subr.mxu0 0.0
  %544 = vmatpush2.msra.mxu0 0.0
  %545 = vmatprep.subr.mxu0 0.0
  %546 = vmatpush2.msra.mxu0 0.0
  %547 = vmatprep.subr.mxu0 0.0
  %548 = vmatpush2.msra.mxu0 0.0
  %549 = vmatprep.mubr.f32.mxu0 0.0
  %550 = vmatmul.mubr.f32.gmra.mxu0 %v479
  %v551 = vpop.f32.mrf.mxu0
  %v552 = vadd.f32 %v466, %v551
  %v553 = vpop.f32.mrf.mxu0
  %v554 = vadd.f32 %v466, %v553
  %555 = vmatprep.mubr.f32.mxu0 0.0
  %556 = vmatmul.mubr.f32.gmra.mxu0 %v481
  %v557 = vpop.f32.mrf.mxu0
  %v558 = vadd.f32 %v471, %v557
  %v559 = vpop.f32.mrf.mxu0
  %v560 = vadd.f32 %v471, %v559
  %561 = vmatprep.mubr.f32.mxu0 0.0
  %562 = vmatmul.mubr.f32.gmra.mxu0 %v483
  %v563 = vpop.f32.mrf.mxu0
  %v564 = vadd.f32 %v476, %v563
  %v565 = vpop.f32.mrf.mxu0
  %v566 = vadd.f32 %v476, %v565
  %567 = vdwg.mxu0
  %v568 = vmax.f32 %v552, 0.0
  %v569 = vmax.f32 %v554, 0.0
  %v570 = vmax.f32 %v558, 0.0
  %v571 = vmax.f32 %v560, 0.0
  %v572 = vmax.f32 %v564, 0.0
  %v573 = vmax.f32 %v566, 0.0
  %574 = vxpose.xlu0.b32.start [1/16] %v568, 128
  %575 = vxpose.xlu0.b32.cont [2/16] %v570, 128
  %576 = vxpose.xlu0.b32.cont [3/16] %v572, 128
  %577 = vxpose.xlu0.b32.cont [4/16] 0.0, 128
  %578 = vxpose.xlu0.b32.cont [5/16] 0.0, 128
  %579 = vxpose.xlu0.b32.cont [6/16] 0.0, 128
  %580 = vxpose.xlu0.b32.cont [7/16] 0.0, 128
  %581 = vxpose.xlu0.b32.cont [8/16] 0.0, 128
  %582 = vxpose.xlu0.b32.cont [9/16] 0.0, 128
  %583 = vxpose.xlu0.b32.cont [10/16] 0.0, 128
  %584 = vxpose.xlu0.b32.cont [11/16] 0.0, 128
  %585 = vxpose.xlu0.b32.cont [12/16] 0.0, 128
  %586 = vxpose.xlu0.b32.cont [13/16] 0.0, 128
  %587 = vxpose.xlu0.b32.cont [14/16] 0.0, 128
  %588 = vxpose.xlu0.b32.cont [15/16] 0.0, 128
  %589 = vxpose.xlu0.b32.end [16/16] 0.0, 128
  %v590 = vpop.trf.xlu0
  %v591 = vpop.trf.xlu0
  %v592 = vpop.trf.xlu0
  %v593 = vpop.trf.xlu0
  %v594 = vpop.trf.xlu0
  %v595 = vpop.trf.xlu0
  %v596 = vpop.trf.xlu0
  %v597 = vpop.trf.xlu0
  %v598 = vpop.trf.xlu0
  %v599 = vpop.trf.xlu0
  %v600 = vpop.trf.xlu0
  %v601 = vpop.trf.xlu0
  %v602 = vpop.trf.xlu0
  %v603 = vpop.trf.xlu0
  %v604 = vpop.trf.xlu0
  %v605 = vpop.trf.xlu0
  %606 = vxpose.xlu0.b32.start [1/16] %v569, 128
  %607 = vxpose.xlu0.b32.cont [2/16] %v571, 128
  %608 = vxpose.xlu0.b32.cont [3/16] %v573, 128
  %609 = vxpose.xlu0.b32.cont [4/16] 0.0, 128
  %610 = vxpose.xlu0.b32.cont [5/16] 0.0, 128
  %611 = vxpose.xlu0.b32.cont [6/16] 0.0, 128
  %612 = vxpose.xlu0.b32.cont [7/16] 0.0, 128
  %613 = vxpose.xlu0.b32.cont [8/16] 0.0, 128
  %614 = vxpose.xlu0.b32.cont [9/16] 0.0, 128
  %615 = vxpose.xlu0.b32.cont [10/16] 0.0, 128
  %616 = vxpose.xlu0.b32.cont [11/16] 0.0, 128
  %617 = vxpose.xlu0.b32.cont [12/16] 0.0, 128
  %618 = vxpose.xlu0.b32.cont [13/16] 0.0, 128
  %619 = vxpose.xlu0.b32.cont [14/16] 0.0, 128
  %620 = vxpose.xlu0.b32.cont [15/16] 0.0, 128
  %621 = vxpose.xlu0.b32.end [16/16] 0.0, 128
  %v622 = vpop.trf.xlu0
  %v623 = vpop.trf.xlu0
  %v624 = vpop.trf.xlu0
  %v625 = vpop.trf.xlu0
  %v626 = vpop.trf.xlu0
  %v627 = vpop.trf.xlu0
  %v628 = vpop.trf.xlu0
  %v629 = vpop.trf.xlu0
  %v630 = vpop.trf.xlu0
  %v631 = vpop.trf.xlu0
  %v632 = vpop.trf.xlu0
  %v633 = vpop.trf.xlu0
  %v634 = vpop.trf.xlu0
  %v635 = vpop.trf.xlu0
  %v636 = vpop.trf.xlu0
  %v637 = vpop.trf.xlu0
  %vm638 = vcmask 195584
  %639 = vst.msk [vmem:[%s4] sm:$0xff] %vm638, %v590
  %640 = vst.msk [vmem:[%s4 + $0x8] sm:$0xff] %vm638, %v591
  %641 = vst.msk [vmem:[%s4 + $0x10] sm:$0xff] %vm638, %v592
  %642 = vst.msk [vmem:[%s4 + $0x18] sm:$0xff] %vm638, %v593
  %643 = vst.msk [vmem:[%s4 + $0x20] sm:$0xff] %vm638, %v594
  %644 = vst.msk [vmem:[%s4 + $0x28] sm:$0xff] %vm638, %v595
  %645 = vst.msk [vmem:[%s4 + $0x30] sm:$0xff] %vm638, %v596
  %646 = vst.msk [vmem:[%s4 + $0x38] sm:$0xff] %vm638, %v597
  %647 = vst.msk [vmem:[%s4 + $0x40] sm:$0xff] %vm638, %v598
  %648 = vst.msk [vmem:[%s4 + $0x48] sm:$0xff] %vm638, %v599
  %649 = vst.msk [vmem:[%s4 + $0x50] sm:$0xff] %vm638, %v600
  %650 = vst.msk [vmem:[%s4 + $0x58] sm:$0xff] %vm638, %v601
  %651 = vst.msk [vmem:[%s4 + $0x60] sm:$0xff] %vm638, %v602
  %652 = vst.msk [vmem:[%s4 + $0x68] sm:$0xff] %vm638, %v603
  %653 = vst.msk [vmem:[%s4 + $0x70] sm:$0xff] %vm638, %v604
  %654 = vst.msk [vmem:[%s4 + $0x78] sm:$0xff] %vm638, %v605
  %655 = vst.msk [vmem:[%s4 + $0x80] sm:$0xff] %vm638, %v622
  %656 = vst.msk [vmem:[%s4 + $0x88] sm:$0xff] %vm638, %v623
  %657 = vst.msk [vmem:[%s4 + $0x90] sm:$0xff] %vm638, %v624
  %658 = vst.msk [vmem:[%s4 + $0x98] sm:$0xff] %vm638, %v625
  %659 = vst.msk [vmem:[%s4 + $0xa0] sm:$0xff] %vm638, %v626
  %660 = vst.msk [vmem:[%s4 + $0xa8] sm:$0xff] %vm638, %v627
  %661 = vst.msk [vmem:[%s4 + $0xb0] sm:$0xff] %vm638, %v628
  %662 = vst.msk [vmem:[%s4 + $0xb8] sm:$0xff] %vm638, %v629
  %663 = vst.msk [vmem:[%s4 + $0xc0] sm:$0xff] %vm638, %v630
  %664 = vst.msk [vmem:[%s4 + $0xc8] sm:$0xff] %vm638, %v631
  %665 = vst.msk [vmem:[%s4 + $0xd0] sm:$0xff] %vm638, %v632
  %666 = vst.msk [vmem:[%s4 + $0xd8] sm:$0xff] %vm638, %v633
  %667 = vst.msk [vmem:[%s4 + $0xe0] sm:$0xff] %vm638, %v634
  %668 = vst.msk [vmem:[%s4 + $0xe8] sm:$0xff] %vm638, %v635
  %669 = vst.msk [vmem:[%s4 + $0xf0] sm:$0xff] %vm638, %v636
  %670 = vst.msk [vmem:[%s4 + $0xf8] sm:$0xff] %vm638, %v637
  // Predicated region
  $region18: #{bp_model_forward.7} parent=0 // pred_check
    _
  $region19: #{bp_model_forward.7} parent=0 // pred_check_branch
    %672 = sbr.rel (0) target = $region21
  $region20: #{bp_model_forward.7} parent=0 // pred_region
    _
  $region21: #{bp_model_forward.7} parent=0 // pred_fallthru
    _
  // Predicated region
  $region22: #{bp_model_forward.7} parent=0 // pred_check
    _
  $region23: #{bp_model_forward.7} parent=0 // pred_check_branch
    %674 = sbr.rel (0) target = $region25
  $region24: #{bp_model_forward.7} parent=0 // pred_region
    _
  $region25: #{bp_model_forward.7} parent=0 // pred_fallthru
    _

</llo_original>
